<compile_context>
chip_gen: v7x
topology: tpu7x:2x2x1
jax: 0.10.0
libtpu: 0.0.40
codegen_flags: <defaults>
</compile_context>

<pallas_src>
import functools

import jax
import jax.numpy as jnp
from jax import lax
from jax.experimental import pallas as pl
from jax.experimental.pallas import tpu as pltpu


_SUB = 64  # in-kernel row sub-tile; keeps f32 intermediates well under 64 vregs


def _leaky_relu(x, slope=0.2):
    return jnp.where(x >= 0, x, slope * x)


def _mlp_kernel(x_ref, w1_ref, b1_ref, w2_ref, b2_ref, w3_ref, b3_ref,
                o_ref, h1_ref, *, sub):
    # x_ref: (tb, latent) bf16; W1/W2: bf16 (in, out); w3: (1, 256) f32;
    # biases: f32 (1, out); o_ref: (tb, 1) f32; h1_ref: (tb, 512) bf16 scratch.
    tb = x_ref.shape[0]
    n_sub = tb // sub
    unroll = min(2, n_sub)

    # Small loop-invariant rows, read once per grid step.
    b1 = b1_ref[...]          # (1, 512) f32
    b2 = b2_ref[...]          # (1, 256) f32
    w3 = w3_ref[...]          # (1, 256) f32
    b3 = b3_ref[...]          # (1, 1)   f32

    # ---- Phase 1: layer 1 over the whole batch tile -> bf16 VMEM scratch ----
    def layer1_body(s, carry):
        r = pl.multiple_of(s * sub, sub)
        xs = x_ref[pl.ds(r, sub), :]                                   # bf16 (sub, latent)
        h1 = jnp.dot(xs, w1_ref[...], preferred_element_type=jnp.float32) + b1
        h1_ref[pl.ds(r, sub), :] = _leaky_relu(h1).astype(jnp.bfloat16)
        return carry

    lax.fori_loop(0, n_sub, layer1_body, 0, unroll=unroll)

    # ---- Phase 2: layer 2 (MXU, f32 acc) + layer 3 (VPU mul + lane reduce) ---
    def layer23_body(s, carry):
        r = pl.multiple_of(s * sub, sub)
        h1s = h1_ref[pl.ds(r, sub), :]                                 # bf16 (sub, 512)
        h2 = jnp.dot(h1s, w2_ref[...], preferred_element_type=jnp.float32) + b2
        h2 = _leaky_relu(h2)
        out = jnp.sum(h2 * w3, axis=-1, keepdims=True) + b3            # (sub, 1) f32
        o_ref[pl.ds(r, sub), :] = out.astype(o_ref.dtype)
        return carry

    lax.fori_loop(0, n_sub, layer23_body, 0, unroll=unroll)


def _choose_batch_tile(B, max_tb):
    # Tiny batch: one block covering the full batch (block == full dims is always legal).
    if B <= 128:
        return B
    # Otherwise: a multiple of the 64-row sub-tile (also satisfies the bf16 (16,128)
    # sublane-packing minimum), at least 2 grid steps, and an even number of grid
    # steps when possible (v7x megacore shards the single "parallel" batch axis).
    tb = min(max_tb, pl.cdiv(B, 2))
    tb = max(_SUB, pl.cdiv(tb, _SUB) * _SUB)
    steps = pl.cdiv(B, tb)
    if steps > 2 and steps % 2 == 1:
        tb2 = pl.cdiv(pl.cdiv(B, steps + 1), _SUB) * _SUB
        if tb2 >= _SUB and pl.cdiv(B, tb2) % 2 == 0:
            tb = tb2
    return tb


@functools.partial(jax.jit, static_argnames=("tb",))
def discriminator_t(x, w1, b1, w2, b2, w3, b3, *, tb=2048):
    """DiscriminatorT forward: x (B, latent) f32 -> (B, 1) f32.

    w1: (latent, 512), w2: (512, 256) stored transposed (in, out), ideally bf16.
    w3: (1, 256) f32 (PyTorch layout, used on the VPU).  Biases: (1, out) f32.
    """
    B, latent = x.shape
    h1_dim = w1.shape[1]
    h2_dim = w2.shape[1]

    tb_eff = _choose_batch_tile(B, tb)
    sub = _SUB if tb_eff % _SUB == 0 else tb_eff
    grid = (pl.cdiv(B, tb_eff),)  # ragged tail via Pallas partial blocks (no pad/slice)

    # bf16 MXU operands (f32 accumulation in-kernel); no-op casts if params are
    # already bf16 at the call site.  Biases / w3 row stay f32 (VPU path).
    xb = x.astype(jnp.bfloat16)
    w1b = w1.astype(jnp.bfloat16)
    w2b = w2.astype(jnp.bfloat16)
    w3r = w3.astype(jnp.float32)
    b1f = b1.astype(jnp.float32)
    b2f = b2.astype(jnp.float32)
    b3f = b3.astype(jnp.float32)

    full = lambda i: (0, 0)  # weights/biases: same full block for every grid step

    flops = 2 * B * (latent * h1_dim + h1_dim * h2_dim + h2_dim)
    bytes_accessed = (
        xb.size * 2 + (w1b.size + w2b.size) * 2
        + (b1f.size + b2f.size + w3r.size + b3f.size) * 4 + B * 4
    )

    return pl.pallas_call(
        functools.partial(_mlp_kernel, sub=sub),
        out_shape=jax.ShapeDtypeStruct((B, 1), jnp.float32),
        grid_spec=pltpu.PrefetchScalarGridSpec(
            num_scalar_prefetch=0,
            grid=grid,
            in_specs=[
                pl.BlockSpec((tb_eff, latent), lambda i: (i, 0)),  # x tile (bf16)
                pl.BlockSpec((latent, h1_dim), full),              # W1 (bf16)
                pl.BlockSpec((1, h1_dim), full),                   # b1
                pl.BlockSpec((h1_dim, h2_dim), full),              # W2 (bf16)
                pl.BlockSpec((1, h2_dim), full),                   # b2
                pl.BlockSpec((1, h2_dim), full),                   # w3 row (f32)
                pl.BlockSpec((1, 1), full),                        # b3
            ],
            out_specs=pl.BlockSpec((tb_eff, 1), lambda i: (i, 0)),
            scratch_shapes=[pltpu.VMEM((tb_eff, h1_dim), jnp.bfloat16)],
        ),
        compiler_params=pltpu.CompilerParams(
            dimension_semantics=("parallel",),
        ),
        cost_estimate=pl.CostEstimate(
            flops=flops, transcendentals=0, bytes_accessed=bytes_accessed,
        ),
    )(xb, w1b, b1f, w2b, b2f, w3r, b3f)


def _init_linear(key, in_f, out_f):
    # torch.nn.Linear default init: U(-1/sqrt(in_f), 1/sqrt(in_f)), weight (out, in).
    kw, kb = jax.random.split(key)
    bound = 1.0 / float(in_f) ** 0.5
    w = jax.random.uniform(kw, (out_f, in_f), jnp.float32, -bound, bound)
    b = jax.random.uniform(kb, (1, out_f), jnp.float32, -bound, bound)
    return w, b


def _reference(x, w1_t, b1, w2_t, b2, w3_row, b3):
    # Mirrors the kernel's dtype strategy: bf16 MXU operands, f32 accumulation,
    # f32 elementwise, f32 VPU-style final reduction.
    f32, bf16 = jnp.float32, jnp.bfloat16
    h1 = jnp.dot(x.astype(bf16), w1_t.astype(bf16), preferred_element_type=f32) + b1
    h1 = jnp.where(h1 >= 0, h1, 0.2 * h1)
    h2 = jnp.dot(h1.astype(bf16), w2_t.astype(bf16), preferred_element_type=f32) + b2
    h2 = jnp.where(h2 >= 0, h2, 0.2 * h2)
    return jnp.sum(h2 * w3_row, axis=-1, keepdims=True) + b3


if __name__ == "__main__":
    latent = 32

    key = jax.random.PRNGKey(0)
    kx, k1, k2, k3 = jax.random.split(key, 4)

    w1, b1 = _init_linear(k1, latent, 512)   # (512, 32), (1, 512)
    w2, b2 = _init_linear(k2, 512, 256)      # (256, 512), (1, 256)
    w3, b3 = _init_linear(k3, 256, 1)        # (1, 256), (1, 1)

    # Keep MXU params in bf16 once, outside the per-call wrapper (perf review item).
    w1_t = jnp.asarray(w1.T, jnp.bfloat16)   # (latent, 512)
    w2_t = jnp.asarray(w2.T, jnp.bfloat16)   # (512, 256)
    w3_r = jnp.asarray(w3, jnp.float32)      # (1, 256)

    # batch=256: multi-step grid + sub-tiling; batch=200: ragged tail (partial last block).
    for batch in (256, 200):
        x = jax.random.normal(kx, (batch, latent), jnp.float32)
        out = jax.block_until_ready(discriminator_t(x, w1_t, b1, w2_t, b2, w3_r, b3))
        ref = _reference(x, w1_t, b1, w2_t, b2, w3_r, b3)
        assert out.shape == (batch, 1)
        max_err = float(jnp.max(jnp.abs(out - ref)))
        assert jnp.allclose(out, ref, atol=5e-3, rtol=5e-3), f"mismatch vs ref: {max_err}"

    print("KERNEL_OK")
</pallas_src>

<mosaic_0001>
module attributes {stable_mosaic.version = 11 : i64} {
  func.func @_mlp_kernel(%arg0: i32, %arg1: memref<128x32xbf16, #tpu.memory_space<vmem>>, %arg2: memref<32x512xbf16, #tpu.memory_space<vmem>>, %arg3: memref<1x512xf32, #tpu.memory_space<vmem>>, %arg4: memref<512x256xbf16, #tpu.memory_space<vmem>>, %arg5: memref<1x256xf32, #tpu.memory_space<vmem>>, %arg6: memref<1x256xf32, #tpu.memory_space<vmem>>, %arg7: memref<1x1xf32, #tpu.memory_space<vmem>>, %arg8: memref<128x1xf32, #tpu.memory_space<vmem>>, %arg9: memref<128x512xbf16, #tpu.memory_space<vmem>>) attributes {dimension_semantics = [#tpu.dimension_semantics<parallel>], iteration_bounds = array<i64: 2>, scalar_prefetch = 0 : i64, scratch_operands = 1 : i64, tpu.core_type = #tpu.core_type<tc>, window_params = [{transform_indices = @transform_0, window_bounds = array<i64: 128, 32>}, {pipeline_mode = #tpu.pipeline_mode<synchronous>, transform_indices = @transform_1, window_bounds = array<i64: 32, 512>}, {pipeline_mode = #tpu.pipeline_mode<synchronous>, transform_indices = @transform_2, window_bounds = array<i64: 1, 512>}, {pipeline_mode = #tpu.pipeline_mode<synchronous>, transform_indices = @transform_3, window_bounds = array<i64: 512, 256>}, {pipeline_mode = #tpu.pipeline_mode<synchronous>, transform_indices = @transform_4, window_bounds = array<i64: 1, 256>}, {pipeline_mode = #tpu.pipeline_mode<synchronous>, transform_indices = @transform_5, window_bounds = array<i64: 1, 256>}, {pipeline_mode = #tpu.pipeline_mode<synchronous>, transform_indices = @transform_6, window_bounds = array<i64: 1, 1>}, {transform_indices = @transform_7, window_bounds = array<i64: 128, 1>}]} {
    %c0 = arith.constant 0 : index
    %c0_0 = arith.constant 0 : index
    %0 = vector.load %arg3[%c0, %c0_0] : memref<1x512xf32, #tpu.memory_space<vmem>>, vector<1x512xf32>
    %c0_1 = arith.constant 0 : index
    %c0_2 = arith.constant 0 : index
    %1 = vector.load %arg5[%c0_1, %c0_2] : memref<1x256xf32, #tpu.memory_space<vmem>>, vector<1x256xf32>
    %c0_3 = arith.constant 0 : index
    %c0_4 = arith.constant 0 : index
    %2 = vector.load %arg6[%c0_3, %c0_4] : memref<1x256xf32, #tpu.memory_space<vmem>>, vector<1x256xf32>
    %c0_5 = arith.constant 0 : index
    %c0_6 = arith.constant 0 : index
    %3 = vector.load %arg7[%c0_5, %c0_6] : memref<1x1xf32, #tpu.memory_space<vmem>>, vector<1x1xf32>
    %c0_i32 = arith.constant 0 : i32
    %c64_i32 = arith.constant 64 : i32
    %4 = arith.muli %c0_i32, %c64_i32 : i32
    %5 = tpu.assume_multiple %4, 64 : i32
    %6 = arith.index_cast %5 : i32 to index
    %c0_7 = arith.constant 0 : index
    %7 = vector.load %arg1[%6, %c0_7] : memref<128x32xbf16, #tpu.memory_space<vmem>>, vector<64x32xbf16>
    %c0_8 = arith.constant 0 : index
    %c0_9 = arith.constant 0 : index
    %8 = vector.load %arg2[%c0_8, %c0_9] : memref<32x512xbf16, #tpu.memory_space<vmem>>, vector<32x512xbf16>
    %cst = arith.constant dense<0.000000e+00> : vector<64x512xf32>
    %9 = tpu.matmul %7, %8, %cst {dimension_numbers = #tpu.dot_dimension_numbers<[1], [0], [0], [1], [0, 0, 1, 1], [], []>} : vector<64x32xbf16>, vector<32x512xbf16>, vector<64x512xf32> -> vector<64x512xf32>
    %10 = vector.broadcast %0 : vector<1x512xf32> to vector<64x512xf32>
    %11 = arith.addf %9, %10 : vector<64x512xf32>
    %cst_10 = arith.constant 0.000000e+00 : f32
    %12 = vector.broadcast %cst_10 : f32 to vector<64x512xf32>
    %13 = arith.cmpf oge, %11, %12 : vector<64x512xf32>
    %cst_11 = arith.constant 2.000000e-01 : f32
    %14 = vector.broadcast %cst_11 : f32 to vector<64x512xf32>
    %15 = arith.mulf %14, %11 : vector<64x512xf32>
    %16 = arith.select %13, %11, %15 : vector<64x512xi1>, vector<64x512xf32>
    %17 = arith.truncf %16 : vector<64x512xf32> to vector<64x512xbf16>
    %18 = arith.index_cast %5 : i32 to index
    %c0_12 = arith.constant 0 : index
    %19 = vector.load %arg9[%18, %c0_12] : memref<128x512xbf16, #tpu.memory_space<vmem>>, vector<64x512xbf16>
    tpu.vector_store %arg9[%18, %c0_12], %17 {strides = array<i32>} : memref<128x512xbf16, #tpu.memory_space<vmem>>, vector<64x512xbf16>,
    %c1_i32 = arith.constant 1 : i32
    %c64_i32_13 = arith.constant 64 : i32
    %20 = arith.muli %c1_i32, %c64_i32_13 : i32
    %21 = tpu.assume_multiple %20, 64 : i32
    %22 = arith.index_cast %21 : i32 to index
    %c0_14 = arith.constant 0 : index
    %23 = vector.load %arg1[%22, %c0_14] : memref<128x32xbf16, #tpu.memory_space<vmem>>, vector<64x32xbf16>
    %c0_15 = arith.constant 0 : index
    %c0_16 = arith.constant 0 : index
    %24 = vector.load %arg2[%c0_15, %c0_16] : memref<32x512xbf16, #tpu.memory_space<vmem>>, vector<32x512xbf16>
    %cst_17 = arith.constant dense<0.000000e+00> : vector<64x512xf32>
    %25 = tpu.matmul %23, %24, %cst_17 {dimension_numbers = #tpu.dot_dimension_numbers<[1], [0], [0], [1], [0, 0, 1, 1], [], []>} : vector<64x32xbf16>, vector<32x512xbf16>, vector<64x512xf32> -> vector<64x512xf32>
    %26 = vector.broadcast %0 : vector<1x512xf32> to vector<64x512xf32>
    %27 = arith.addf %25, %26 : vector<64x512xf32>
    %cst_18 = arith.constant 0.000000e+00 : f32
    %28 = vector.broadcast %cst_18 : f32 to vector<64x512xf32>
    %29 = arith.cmpf oge, %27, %28 : vector<64x512xf32>
    %cst_19 = arith.constant 2.000000e-01 : f32
    %30 = vector.broadcast %cst_19 : f32 to vector<64x512xf32>
    %31 = arith.mulf %30, %27 : vector<64x512xf32>
    %32 = arith.select %29, %27, %31 : vector<64x512xi1>, vector<64x512xf32>
    %33 = arith.truncf %32 : vector<64x512xf32> to vector<64x512xbf16>
    %34 = arith.index_cast %21 : i32 to index
    %c0_20 = arith.constant 0 : index
    %35 = vector.load %arg9[%34, %c0_20] : memref<128x512xbf16, #tpu.memory_space<vmem>>, vector<64x512xbf16>
    tpu.vector_store %arg9[%34, %c0_20], %33 {strides = array<i32>} : memref<128x512xbf16, #tpu.memory_space<vmem>>, vector<64x512xbf16>,
    %c2_i32 = arith.constant 2 : i32
    %c0_i32_21 = arith.constant 0 : i32
    %c64_i32_22 = arith.constant 64 : i32
    %36 = arith.muli %c0_i32_21, %c64_i32_22 : i32
    %37 = tpu.assume_multiple %36, 64 : i32
    %38 = arith.index_cast %37 : i32 to index
    %c0_23 = arith.constant 0 : index
    %39 = vector.load %arg9[%38, %c0_23] : memref<128x512xbf16, #tpu.memory_space<vmem>>, vector<64x512xbf16>
    %c0_24 = arith.constant 0 : index
    %c0_25 = arith.constant 0 : index
    %40 = vector.load %arg4[%c0_24, %c0_25] : memref<512x256xbf16, #tpu.memory_space<vmem>>, vector<512x256xbf16>
    %cst_26 = arith.constant dense<0.000000e+00> : vector<64x256xf32>
    %41 = tpu.matmul %39, %40, %cst_26 {dimension_numbers = #tpu.dot_dimension_numbers<[1], [0], [0], [1], [0, 0, 1, 1], [], []>} : vector<64x512xbf16>, vector<512x256xbf16>, vector<64x256xf32> -> vector<64x256xf32>
    %42 = vector.broadcast %1 : vector<1x256xf32> to vector<64x256xf32>
    %43 = arith.addf %41, %42 : vector<64x256xf32>
    %cst_27 = arith.constant 0.000000e+00 : f32
    %44 = vector.broadcast %cst_27 : f32 to vector<64x256xf32>
    %45 = arith.cmpf oge, %43, %44 : vector<64x256xf32>
    %cst_28 = arith.constant 2.000000e-01 : f32
    %46 = vector.broadcast %cst_28 : f32 to vector<64x256xf32>
    %47 = arith.mulf %46, %43 : vector<64x256xf32>
    %48 = arith.select %45, %43, %47 : vector<64x256xi1>, vector<64x256xf32>
    %49 = vector.broadcast %2 : vector<1x256xf32> to vector<64x256xf32>
    %50 = arith.mulf %48, %49 : vector<64x256xf32>
    %cst_29 = arith.constant dense<0.000000e+00> : vector<64xf32>
    %51 = vector.multi_reduction <add>, %50, %cst_29 [1] : vector<64x256xf32> to vector<64xf32>
    %52 = vector.shape_cast %51 : vector<64xf32> to vector<64x1xf32>
    %53 = vector.broadcast %3 : vector<1x1xf32> to vector<64x1xf32>
    %54 = arith.addf %52, %53 : vector<64x1xf32>
    %55 = arith.index_cast %37 : i32 to index
    %c0_30 = arith.constant 0 : index
    %56 = vector.load %arg8[%55, %c0_30] : memref<128x1xf32, #tpu.memory_space<vmem>>, vector<64x1xf32>
    tpu.vector_store %arg8[%55, %c0_30], %54 {strides = array<i32>} : memref<128x1xf32, #tpu.memory_space<vmem>>, vector<64x1xf32>,
    %c1_i32_31 = arith.constant 1 : i32
    %c64_i32_32 = arith.constant 64 : i32
    %57 = arith.muli %c1_i32_31, %c64_i32_32 : i32
    %58 = tpu.assume_multiple %57, 64 : i32
    %59 = arith.index_cast %58 : i32 to index
    %c0_33 = arith.constant 0 : index
    %60 = vector.load %arg9[%59, %c0_33] : memref<128x512xbf16, #tpu.memory_space<vmem>>, vector<64x512xbf16>
    %c0_34 = arith.constant 0 : index
    %c0_35 = arith.constant 0 : index
    %61 = vector.load %arg4[%c0_34, %c0_35] : memref<512x256xbf16, #tpu.memory_space<vmem>>, vector<512x256xbf16>
    %cst_36 = arith.constant dense<0.000000e+00> : vector<64x256xf32>
    %62 = tpu.matmul %60, %61, %cst_36 {dimension_numbers = #tpu.dot_dimension_numbers<[1], [0], [0], [1], [0, 0, 1, 1], [], []>} : vector<64x512xbf16>, vector<512x256xbf16>, vector<64x256xf32> -> vector<64x256xf32>
    %63 = vector.broadcast %1 : vector<1x256xf32> to vector<64x256xf32>
    %64 = arith.addf %62, %63 : vector<64x256xf32>
    %cst_37 = arith.constant 0.000000e+00 : f32
    %65 = vector.broadcast %cst_37 : f32 to vector<64x256xf32>
    %66 = arith.cmpf oge, %64, %65 : vector<64x256xf32>
    %cst_38 = arith.constant 2.000000e-01 : f32
    %67 = vector.broadcast %cst_38 : f32 to vector<64x256xf32>
    %68 = arith.mulf %67, %64 : vector<64x256xf32>
    %69 = arith.select %66, %64, %68 : vector<64x256xi1>, vector<64x256xf32>
    %70 = vector.broadcast %2 : vector<1x256xf32> to vector<64x256xf32>
    %71 = arith.mulf %69, %70 : vector<64x256xf32>
    %cst_39 = arith.constant dense<0.000000e+00> : vector<64xf32>
    %72 = vector.multi_reduction <add>, %71, %cst_39 [1] : vector<64x256xf32> to vector<64xf32>
    %73 = vector.shape_cast %72 : vector<64xf32> to vector<64x1xf32>
    %74 = vector.broadcast %3 : vector<1x1xf32> to vector<64x1xf32>
    %75 = arith.addf %73, %74 : vector<64x1xf32>
    %76 = arith.index_cast %58 : i32 to index
    %c0_40 = arith.constant 0 : index
    %77 = vector.load %arg8[%76, %c0_40] : memref<128x1xf32, #tpu.memory_space<vmem>>, vector<64x1xf32>
    tpu.vector_store %arg8[%76, %c0_40], %75 {strides = array<i32>} : memref<128x1xf32, #tpu.memory_space<vmem>>, vector<64x1xf32>,
    %c2_i32_41 = arith.constant 2 : i32
    return
  }
  func.func @transform_0(%arg0: i32) -> (i32, i32) {
    %c0_i32 = arith.constant 0 : i32
    %c0_i32_0 = arith.constant 0 : i32
    return %arg0, %c0_i32 : i32, i32
  }
  func.func @transform_1(%arg0: i32) -> (i32, i32) {
    %c0_i32 = arith.constant 0 : i32
    %c0_i32_0 = arith.constant 0 : i32
    %c0_i32_1 = arith.constant 0 : i32
    return %c0_i32, %c0_i32_0 : i32, i32
  }
  func.func @transform_2(%arg0: i32) -> (i32, i32) {
    %c0_i32 = arith.constant 0 : i32
    %c0_i32_0 = arith.constant 0 : i32
    %c0_i32_1 = arith.constant 0 : i32
    return %c0_i32, %c0_i32_0 : i32, i32
  }
  func.func @transform_3(%arg0: i32) -> (i32, i32) {
    %c0_i32 = arith.constant 0 : i32
    %c0_i32_0 = arith.constant 0 : i32
    %c0_i32_1 = arith.constant 0 : i32
    return %c0_i32, %c0_i32_0 : i32, i32
  }
  func.func @transform_4(%arg0: i32) -> (i32, i32) {
    %c0_i32 = arith.constant 0 : i32
    %c0_i32_0 = arith.constant 0 : i32
    %c0_i32_1 = arith.constant 0 : i32
    return %c0_i32, %c0_i32_0 : i32, i32
  }
  func.func @transform_5(%arg0: i32) -> (i32, i32) {
    %c0_i32 = arith.constant 0 : i32
    %c0_i32_0 = arith.constant 0 : i32
    %c0_i32_1 = arith.constant 0 : i32
    return %c0_i32, %c0_i32_0 : i32, i32
  }
  func.func @transform_6(%arg0: i32) -> (i32, i32) {
    %c0_i32 = arith.constant 0 : i32
    %c0_i32_0 = arith.constant 0 : i32
    %c0_i32_1 = arith.constant 0 : i32
    return %c0_i32, %c0_i32_0 : i32, i32
  }
  func.func @transform_7(%arg0: i32) -> (i32, i32) {
    %c0_i32 = arith.constant 0 : i32
    %c0_i32_0 = arith.constant 0 : i32
    return %arg0, %c0_i32 : i32, i32
  }
}

</mosaic_0001>

<llo_original>
// kernel: discriminator_t.1
$region0: #{discriminator_t.1}
  #allocation0 [shape = 'u32[]', space=smem, size = 0x4, offset = 0x4, fixed_abs, tag = 'smem constant byte address 0x4 - core index']
  #allocation1 [shape = 'u32[144,128]{1,0:T(1,128)}', space=vmem, size = 0x12000, scoped, tag = 'internal scratch']
  #allocation2 [shape = 'bf16[128,512]{1,0:T(16,128)(2,1)}', space=vmem, size = 0x20000, scoped, tag = 'scratch operand']
  #allocation3 [shape = 'f32[1,1]{1,0:T(1,128)S(1)}', space=vmem, size = 0x200, scoped, tag = 'scoped memory for discriminator_t.1']
  %s0 = inlined_call_operand.vmem [shape: bf16[256,32], index: 0, kind: input, shape index: {}]
  %s1 = inlined_call_operand.vmem [shape: bf16[32,512], index: 1, kind: input, shape index: {}]
  %s2 = inlined_call_operand.vmem [shape: f32[1,512], index: 2, kind: input, shape index: {}]
  %s3 = inlined_call_operand.hbm [shape: bf16[512,256], index: 3, kind: input, shape index: {}]
  %s4 = inlined_call_operand.vmem [shape: f32[1,256], index: 4, kind: input, shape index: {}]
  %s5 = inlined_call_operand.vmem [shape: f32[1,256], index: 5, kind: input, shape index: {}]
  %s6 = inlined_call_operand.<no memory space> [shape: f32[1,1], index: 6, kind: input, shape index: {}]
  %s7 = inlined_call_operand.vmem [shape: f32[256,1], index: 7, kind: output, shape index: {}]
  %s8 = sld [smem:[#allocation0]]
  $region65: #{discriminator_t.1} parent=0
    _
  %s10 = ssub.s32 1, %s8
  %s11 = scalar_select 0, %s10, %s8
  %v12 = vstv %s6
  %13 = vst [vmem:[#allocation3] sm:$0x1] %v12
  $region1: #{discriminator_t.1} parent=0
    #allocation4 [shape = 'u8[262144]{0}', space=vmem, size = 0x40000, scoped, tag = 'input window, operand 3, single buffered']
    #allocation5 [shape = 's32[2]{0}', space=sflag, size = 0x8, scoped, tag = 'scoped memory for discriminator_t.1']
    %14 = vsyncpa [#allocation5], 0
    loop: start=0, step=1, limit=4
    $region2: #{discriminator_t.1} parent=1 // loop_pre_header
      _
    $region3: #{discriminator_t.1} parent=1 // loop_header
      %s16 = sphi 0, %s20
      %p17 = scmp.ge.s32.totalorder %s16, 4
      %s26 = sphi 0, %s28
      %s29 = sphi 0, %s26
      %s30 = sphi 0, %s29
      %s46 = sphi 0, %s30
      %s50 = sphi 0, %s50
      %s52 = sphi 0, %s50
      %s53 = sphi 0, %s52
      %s67 = sphi 0, %s53
      %s71 = sphi 0, %s71
      %s73 = sphi 0, %s71
      %s74 = sphi 0, %s73
      %s88 = sphi 0, %s74
      %s92 = sphi 0, %s92
      %s94 = sphi 0, %s92
      %s95 = sphi 0, %s94
      %s109 = sphi 0, %s95
      %s113 = sphi 0, %s113
      %s115 = sphi 0, %s113
      %s116 = sphi 0, %s115
      %s130 = sphi 0, %s116
      %s134 = sphi 0, %s134
      %s136 = sphi 0, %s134
      %s137 = sphi 0, %s136
      %s151 = sphi 0, %s137
      %s155 = sphi 0, %s155
      %s157 = sphi 0, %s155
      %s158 = sphi 0, %s157
      %s172 = sphi 0, %s158
      %s178 = sphi 0, %s180
      %s181 = sphi 0, %s178
      %s182 = sphi 0, %s181
      %s198 = sphi 0, %s182
    $region4: #{discriminator_t.1} parent=1 // loop_header_branch
      %19 = sbr.rel (%p17) target = $region8
    $region5: #{discriminator_t.1} parent=1 // loop_body
      %s21 = ssub.s32 %s16, 1
      %s22 = ssub.s32 %s16, 2
      %s23 = sadd.s32 %s16, 1
      %s24 = ssub.s32 %s16, %s23
      %p25 = scmp.eq.s32.totalorder %s24, 0
      %s27 = sadd.s32 %s26, 1
      %s28 = scalar_select %p25, %s26, %s27
      %p31 = pneg %p25
      %p32 = scmp.eq.s32.totalorder %s16, 1
      %p33 = por %p31, %p32
      %p34 = scmp.ne.s32.totalorder %s26, %s29
      %p35 = scmp.eq.s32.totalorder %s16, 0
      %p36 = por %p34, %p35
      %p37 = scmp.ne.s32.totalorder %s26, %s29
      %p38 = scmp.eq.s32.totalorder %s21, 1
      %p39 = por %p37, %p38
      %p40 = scmp.ne.s32.totalorder %s29, %s30
      %p41 = scmp.eq.s32.totalorder %s21, 0
      %p42 = por %p40, %p41
      %p43 = scmp.ne.s32.totalorder %s29, %s30
      %p44 = scmp.eq.s32.totalorder %s22, 1
      %p45 = por %p43, %p44
      %p47 = scmp.ne.s32.totalorder %s30, %s46
      %p48 = scmp.eq.s32.totalorder %s22, 0
      %p49 = por %p47, %p48
      %s51 = sadd.s32 %s50, 1
      %p54 = scmp.eq.s32.totalorder %s16, 1
      %p55 = scmp.ne.s32.totalorder %s50, %s52
      %p56 = scmp.eq.s32.totalorder %s16, 0
      %p57 = por %p55, %p56
      %p58 = scmp.ne.s32.totalorder %s50, %s52
      %p59 = scmp.eq.s32.totalorder %s21, 1
      %p60 = por %p58, %p59
      %p61 = scmp.ne.s32.totalorder %s52, %s53
      %p62 = scmp.eq.s32.totalorder %s21, 0
      %p63 = por %p61, %p62
      %p64 = scmp.ne.s32.totalorder %s52, %s53
      %p65 = scmp.eq.s32.totalorder %s22, 1
      %p66 = por %p64, %p65
      %p68 = scmp.ne.s32.totalorder %s53, %s67
      %p69 = scmp.eq.s32.totalorder %s22, 0
      %p70 = por %p68, %p69
      %s72 = sadd.s32 %s71, 1
      %p75 = scmp.eq.s32.totalorder %s16, 1
      %p76 = scmp.ne.s32.totalorder %s71, %s73
      %p77 = scmp.eq.s32.totalorder %s16, 0
      %p78 = por %p76, %p77
      %p79 = scmp.ne.s32.totalorder %s71, %s73
      %p80 = scmp.eq.s32.totalorder %s21, 1
      %p81 = por %p79, %p80
      %p82 = scmp.ne.s32.totalorder %s73, %s74
      %p83 = scmp.eq.s32.totalorder %s21, 0
      %p84 = por %p82, %p83
      %p85 = scmp.ne.s32.totalorder %s73, %s74
      %p86 = scmp.eq.s32.totalorder %s22, 1
      %p87 = por %p85, %p86
      %p89 = scmp.ne.s32.totalorder %s74, %s88
      %p90 = scmp.eq.s32.totalorder %s22, 0
      %p91 = por %p89, %p90
      %s93 = sadd.s32 %s92, 1
      %p96 = scmp.eq.s32.totalorder %s16, 1
      %p97 = scmp.ne.s32.totalorder %s92, %s94
      %p98 = scmp.eq.s32.totalorder %s16, 0
      %p99 = por %p97, %p98
      %p100 = scmp.ne.s32.totalorder %s92, %s94
      %p101 = scmp.eq.s32.totalorder %s21, 1
      %p102 = por %p100, %p101
      %p103 = scmp.ne.s32.totalorder %s94, %s95
      %p104 = scmp.eq.s32.totalorder %s21, 0
      %p105 = por %p103, %p104
      %p106 = scmp.ne.s32.totalorder %s94, %s95
      %p107 = scmp.eq.s32.totalorder %s22, 1
      %p108 = por %p106, %p107
      %p110 = scmp.ne.s32.totalorder %s95, %s109
      %p111 = scmp.eq.s32.totalorder %s22, 0
      %p112 = por %p110, %p111
      %s114 = sadd.s32 %s113, 1
      %p117 = scmp.eq.s32.totalorder %s16, 1
      %p118 = scmp.ne.s32.totalorder %s113, %s115
      %p119 = scmp.eq.s32.totalorder %s16, 0
      %p120 = por %p118, %p119
      %p121 = scmp.ne.s32.totalorder %s113, %s115
      %p122 = scmp.eq.s32.totalorder %s21, 1
      %p123 = por %p121, %p122
      %p124 = scmp.ne.s32.totalorder %s115, %s116
      %p125 = scmp.eq.s32.totalorder %s21, 0
      %p126 = por %p124, %p125
      %p127 = scmp.ne.s32.totalorder %s115, %s116
      %p128 = scmp.eq.s32.totalorder %s22, 1
      %p129 = por %p127, %p128
      %p131 = scmp.ne.s32.totalorder %s116, %s130
      %p132 = scmp.eq.s32.totalorder %s22, 0
      %p133 = por %p131, %p132
      %s135 = sadd.s32 %s134, 1
      %p138 = scmp.eq.s32.totalorder %s16, 1
      %p139 = scmp.ne.s32.totalorder %s134, %s136
      %p140 = scmp.eq.s32.totalorder %s16, 0
      %p141 = por %p139, %p140
      %p142 = scmp.ne.s32.totalorder %s134, %s136
      %p143 = scmp.eq.s32.totalorder %s21, 1
      %p144 = por %p142, %p143
      %p145 = scmp.ne.s32.totalorder %s136, %s137
      %p146 = scmp.eq.s32.totalorder %s21, 0
      %p147 = por %p145, %p146
      %p148 = scmp.ne.s32.totalorder %s136, %s137
      %p149 = scmp.eq.s32.totalorder %s22, 1
      %p150 = por %p148, %p149
      %p152 = scmp.ne.s32.totalorder %s137, %s151
      %p153 = scmp.eq.s32.totalorder %s22, 0
      %p154 = por %p152, %p153
      %s156 = sadd.s32 %s155, 1
      %p159 = scmp.eq.s32.totalorder %s16, 1
      %p160 = scmp.ne.s32.totalorder %s155, %s157
      %p161 = scmp.eq.s32.totalorder %s16, 0
      %p162 = por %p160, %p161
      %p163 = scmp.ne.s32.totalorder %s155, %s157
      %p164 = scmp.eq.s32.totalorder %s21, 1
      %p165 = por %p163, %p164
      %p166 = scmp.ne.s32.totalorder %s157, %s158
      %p167 = scmp.eq.s32.totalorder %s21, 0
      %p168 = por %p166, %p167
      %p169 = scmp.ne.s32.totalorder %s157, %s158
      %p170 = scmp.eq.s32.totalorder %s22, 1
      %p171 = por %p169, %p170
      %p173 = scmp.ne.s32.totalorder %s158, %s172
      %p174 = scmp.eq.s32.totalorder %s22, 0
      %p175 = por %p173, %p174
      %s176 = ssub.s32 %s16, %s23
      %p177 = scmp.eq.s32.totalorder %s176, 0
      %s179 = sadd.s32 %s178, 1
      %s180 = scalar_select %p177, %s178, %s179
      %p183 = pneg %p177
      %p184 = scmp.eq.s32.totalorder %s16, 1
      %p185 = por %p183, %p184
      %p186 = scmp.ne.s32.totalorder %s178, %s181
      %p187 = scmp.eq.s32.totalorder %s16, 0
      %p188 = por %p186, %p187
      %p189 = scmp.ne.s32.totalorder %s178, %s181
      %p190 = scmp.eq.s32.totalorder %s21, 1
      %p191 = por %p189, %p190
      %p192 = scmp.ne.s32.totalorder %s181, %s182
      %p193 = scmp.eq.s32.totalorder %s21, 0
      %p194 = por %p192, %p193
      %p195 = scmp.ne.s32.totalorder %s181, %s182
      %p196 = scmp.eq.s32.totalorder %s22, 1
      %p197 = por %p195, %p196
      %p199 = scmp.ne.s32.totalorder %s182, %s198
      %p200 = scmp.eq.s32.totalorder %s22, 0
      %p201 = por %p199, %p200
      %p202 = scmp.le.s32.totalorder 1, %s16
      %p203 = scmp.lt.s32.totalorder %s16, 3
      %p204 = pnand %p202, %p203
      %p205 = pneg %p204
      // Predicated region
      $region9: #{discriminator_t.1} parent=5 // pred_check
        _
      $region10: #{discriminator_t.1} parent=5 // pred_check_branch
        %207 = sbr.rel (%p204) target = $region12
      $region11: #{discriminator_t.1} parent=5 // pred_region
        %s208 = ssub.s32 %s16, 1
        // Predicated region
        $region13: #{discriminator_t.1} parent=11 // pred_check
          %p209 = pneg %p63
        $region14: #{discriminator_t.1} parent=11 // pred_check_branch
          %211 = sbr.rel (%p209) target = $region16
        $region15: #{discriminator_t.1} parent=11 // pred_region
          _
        $region16: #{discriminator_t.1} parent=11 // pred_fallthru
          _
        // Predicated region
        $region17: #{discriminator_t.1} parent=11 // pred_check
          %p212 = pneg %p84
        $region18: #{discriminator_t.1} parent=11 // pred_check_branch
          %214 = sbr.rel (%p212) target = $region20
        $region19: #{discriminator_t.1} parent=11 // pred_region
          _
        $region20: #{discriminator_t.1} parent=11 // pred_fallthru
          _
        // Predicated region
        $region21: #{discriminator_t.1} parent=11 // pred_check
          %p215 = pneg %p105
        $region22: #{discriminator_t.1} parent=11 // pred_check_branch
          %217 = sbr.rel (%p215) target = $region24
        $region23: #{discriminator_t.1} parent=11 // pred_region
          %s219 = ssub.s32 8192, 8192
          %220 = vsyncadd [#allocation5], %s219
          %s221 = sshll.u32 [#allocation4], 4
          %s222 = int_to_ptr.vmem [resolvable:$true] %s221
          %227 = dma.hbm_to_vmem [thread:$0]  %s3, 8192, %s222, [#allocation5], 128, 128, 8
        $region24: #{discriminator_t.1} parent=11 // pred_fallthru
          _
        // Predicated region
        $region25: #{discriminator_t.1} parent=11 // pred_check
          %p228 = pneg %p126
        $region26: #{discriminator_t.1} parent=11 // pred_check_branch
          %230 = sbr.rel (%p228) target = $region28
        $region27: #{discriminator_t.1} parent=11 // pred_region
          _
        $region28: #{discriminator_t.1} parent=11 // pred_fallthru
          _
        // Predicated region
        $region29: #{discriminator_t.1} parent=11 // pred_check
          %p231 = pneg %p147
        $region30: #{discriminator_t.1} parent=11 // pred_check_branch
          %233 = sbr.rel (%p231) target = $region32
        $region31: #{discriminator_t.1} parent=11 // pred_region
          _
        $region32: #{discriminator_t.1} parent=11 // pred_fallthru
          _
        // Predicated region
        $region33: #{discriminator_t.1} parent=11 // pred_check
          %p234 = pneg %p168
        $region34: #{discriminator_t.1} parent=11 // pred_check_branch
          %236 = sbr.rel (%p234) target = $region36
        $region35: #{discriminator_t.1} parent=11 // pred_region
          _
        $region36: #{discriminator_t.1} parent=11 // pred_fallthru
          _
      $region12: #{discriminator_t.1} parent=5 // pred_fallthru
        _
      %p237 = scmp.lt.s32.totalorder %s16, 2
      // Predicated region
      $region37: #{discriminator_t.1} parent=5 // pred_check
        %p238 = pneg %p237
      $region38: #{discriminator_t.1} parent=5 // pred_check_branch
        %240 = sbr.rel (%p238) target = $region40
      $region39: #{discriminator_t.1} parent=5 // pred_region
        // Predicated region
        $region41: #{discriminator_t.1} parent=39 // pred_check
          %p241 = pneg %p36
        $region42: #{discriminator_t.1} parent=39 // pred_check_branch
          %243 = sbr.rel (%p241) target = $region44
        $region43: #{discriminator_t.1} parent=39 // pred_region
          %s244 = smul.u32 16, %s16
          %p245 = scmp.lt.s32.totalorder %s244, 31
          %s246 = scalar_select %p245, %s244, 31
          %s247 = smul.addr %s246, 4
          %s248 = scalar_lea.vmem %s0, %s247
          %s249 = smul.u32 16, %s16
        $region44: #{discriminator_t.1} parent=39 // pred_fallthru
          _
      $region40: #{discriminator_t.1} parent=5 // pred_fallthru
        _
      %p250 = scmp.le.s32.totalorder 1, %s16
      %p251 = scmp.lt.s32.totalorder %s16, 3
      %p252 = pnand %p250, %p251
      %p253 = pneg %p252
      // Predicated region
      $region45: #{discriminator_t.1} parent=5 // pred_check
        _
      $region46: #{discriminator_t.1} parent=5 // pred_check_branch
        %255 = sbr.rel (%p252) target = $region48
      $region47: #{discriminator_t.1} parent=5 // pred_region
        %s256 = ssub.s32 %s16, 1
        // Predicated region
        $region49: #{discriminator_t.1} parent=47 // pred_check
          %p257 = pneg %p105
        $region50: #{discriminator_t.1} parent=47 // pred_check_branch
          %259 = sbr.rel (%p257) target = $region52
        $region51: #{discriminator_t.1} parent=47 // pred_region
          %260 = dma.done [#allocation5], 8192
        $region52: #{discriminator_t.1} parent=47 // pred_fallthru
          _
        %s261 = smul.u32 16, %s21
        %p262 = scmp.lt.s32.totalorder %s261, 31
        %s263 = scalar_select %p262, %s261, 31
        %s264 = smul.addr %s263, 4
        %s265 = scalar_lea.vmem %s0, %s264
        %p266 = pneg %p42
        %p267 = pneg %p39
        %p268 = pneg %p63
        %p269 = pneg %p60
        %p270 = pneg %p84
        %p271 = pneg %p81
        %p272 = pneg %p105
        %p273 = pneg %p102
        %p274 = pneg %p126
        %p275 = pneg %p123
        %p276 = pneg %p147
        %p277 = pneg %p144
        %p278 = pneg %p168
        %p279 = pneg %p165
        %p280 = pneg %p194
        %p281 = pneg %p191
        %s282 = smul.u32 16, %s21
        %p283 = scmp.lt.s32.totalorder %s282, 31
        %s284 = scalar_select %p283, %s282, 31
        %s285 = smul.addr %s284, 8
        %s286 = scalar_lea.vmem %s7, %s285
        %s287 = smul.u32 16, %s21
        %p288 = scmp.lt.s32.totalorder %s287, 31
        %s289 = scalar_select %p288, %s287, 31
        %s290 = smul.addr %s289, 4
        %s291 = scalar_lea.vmem %s0, %s290
        %s292 = smul.u32 16, %s21
        %s293 = smul.u32 16, %s21
        %p294 = scmp.lt.s32.totalorder %s293, 31
        %s295 = scalar_select %p294, %s293, 31
        %s296 = smul.addr %s295, 8
        %s297 = scalar_lea.vmem %s7, %s296
        %s298 = smul.u32 16, %s21
        %v300 = vld [vmem:[%s2] sm:$0xf]
        %v301 = vld [vmem:[%s4] sm:$0x3]
        %v302 = vld [vmem:[%s5] sm:$0x3]
        %v303 = vld [vmem:[#allocation3] sm:$0x1]
        %v304 = vld [vmem:[%s291] sm:$0xf]
        %v305 = vld [vmem:[%s291 + $0x4] sm:$0xf]
        %v306 = vld [vmem:[%s291 + $0x8] sm:$0xf]
        %v307 = vld [vmem:[%s291 + $0xc] sm:$0xf]
        %v308 = vld [vmem:[%s291 + $0x10] sm:$0xf]
        %v309 = vld [vmem:[%s291 + $0x14] sm:$0xf]
        %v310 = vld [vmem:[%s291 + $0x18] sm:$0xf]
        %v311 = vld [vmem:[%s291 + $0x1c] sm:$0xf]
        %v312 = vld [vmem:[%s1] sm:$0xff]
        %v313 = vld [vmem:[%s1 + $0x8] sm:$0xff]
        %v314 = vld [vmem:[%s1 + $0x10] sm:$0xff]
        %v315 = vld [vmem:[%s1 + $0x18] sm:$0xff]
        %v316 = vld [vmem:[%s1 + $0x20] sm:$0xff]
        %v317 = vld [vmem:[%s1 + $0x28] sm:$0xff]
        %v318 = vld [vmem:[%s1 + $0x30] sm:$0xff]
        %v319 = vld [vmem:[%s1 + $0x38] sm:$0xff]
        %v321 = vlaneseq
        %v322 = vshrl.u32 %v321, 7
        %v323 = vsub.s32 0, %v322
        %v324 = vrot.slane %v300, %v323
        %v325 = vlaneseq
        %v326 = vshrl.u32 %v325, 7
        %v327 = vsub.s32 1, %v326
        %v328 = vrot.slane %v300, %v327
        %v329 = vlaneseq
        %v330 = vshrl.u32 %v329, 7
        %v331 = vsub.s32 2, %v330
        %v332 = vrot.slane %v300, %v331
        %v333 = vlaneseq
        %v334 = vshrl.u32 %v333, 7
        %v335 = vsub.s32 3, %v334
        %v336 = vrot.slane %v300, %v335
        %v349 = vunpack.c.l.b16 %v304
        %v350 = vunpack.c.l.b16 %v305
        %v351 = vunpack.c.l.b16 %v306
        %v352 = vunpack.c.l.b16 %v307
        %v353 = vunpack.c.l.b16 %v308
        %v354 = vunpack.c.l.b16 %v309
        %v355 = vunpack.c.l.b16 %v310
        %v356 = vunpack.c.l.b16 %v311
        %v357 = vpack.c.b16 %v350, %v349
        %v358 = vpack.c.b16 %v352, %v351
        %v359 = vpack.c.b16 %v354, %v353
        %v360 = vpack.c.b16 %v356, %v355
        %v369 = vunpack.c.l.b16 %v312
        %v370 = vunpack.c.h.b16 %v312
        %v371 = vunpack.c.l.b16 %v313
        %v372 = vunpack.c.h.b16 %v313
        %v373 = vunpack.c.l.b16 %v314
        %v374 = vunpack.c.h.b16 %v314
        %v375 = vunpack.c.l.b16 %v315
        %v376 = vunpack.c.h.b16 %v315
        %v377 = vunpack.c.l.b16 %v316
        %v378 = vunpack.c.h.b16 %v316
        %v379 = vunpack.c.l.b16 %v317
        %v380 = vunpack.c.h.b16 %v317
        %v381 = vunpack.c.l.b16 %v318
        %v382 = vunpack.c.h.b16 %v318
        %v383 = vunpack.c.l.b16 %v319
        %v384 = vunpack.c.h.b16 %v319
        %v385 = vpack.c.b16 %v373, %v369
        %v386 = vpack.c.b16 %v374, %v370
        %v387 = vpack.c.b16 %v375, %v371
        %v388 = vpack.c.b16 %v376, %v372
        %v389 = vpack.c.b16 %v381, %v377
        %v390 = vpack.c.b16 %v382, %v378
        %v391 = vpack.c.b16 %v383, %v379
        %v392 = vpack.c.b16 %v384, %v380
        %vm401 = vcmask 261120
        %v403 = vsel %vm401, %v357, 0
        %v406 = vsel %vm401, %v358, 0
        %v409 = vsel %vm401, %v359, 0
        %v412 = vsel %vm401, %v360, 0
        %414 = vmatprep.subr.bf16.mxu0 %v386
        %415 = vmatpush1.bf16.msra.mxu0 %v385
        %416 = vmatprep.subr.bf16.mxu0 %v390
        %417 = vmatpush1.bf16.msra.mxu0 %v389
        %418 = vmatprep.subr.bf16.mxu0 0
        %419 = vmatpush1.bf16.msra.mxu0 0
        %420 = vmatprep.subr.bf16.mxu0 0
        %421 = vmatpush1.bf16.msra.mxu0 0
        %422 = vmatprep.subr.bf16.mxu0 0
        %423 = vmatpush1.bf16.msra.mxu0 0
        %424 = vmatprep.subr.bf16.mxu0 0
        %425 = vmatpush1.bf16.msra.mxu0 0
        %426 = vmatprep.subr.bf16.mxu0 0
        %427 = vmatpush1.bf16.msra.mxu0 0
        %428 = vmatprep.subr.bf16.mxu0 0
        %429 = vmatpush1.bf16.msra.mxu0 0
        %430 = vmatprep.subr.bf16.mxu0 0
        %431 = vmatpush1.bf16.msra.mxu0 0
        %432 = vmatprep.subr.bf16.mxu0 0
        %433 = vmatpush1.bf16.msra.mxu0 0
        %434 = vmatprep.subr.bf16.mxu0 0
        %435 = vmatpush1.bf16.msra.mxu0 0
        %436 = vmatprep.subr.bf16.mxu0 0
        %437 = vmatpush1.bf16.msra.mxu0 0
        %438 = vmatprep.subr.bf16.mxu0 0
        %439 = vmatpush1.bf16.msra.mxu0 0
        %440 = vmatprep.subr.bf16.mxu0 0
        %441 = vmatpush1.bf16.msra.mxu0 0
        %442 = vmatprep.subr.bf16.mxu0 0
        %443 = vmatpush1.bf16.msra.mxu0 0
        %444 = vmatprep.subr.bf16.mxu0 0
        %445 = vmatpush1.bf16.msra.mxu0 0
        %446 = vmatprep.mubr.bf16.mxu0 0
        %447 = vmatmul.mubr.bf16.gmra.mrb[0].mxu0 %v403
        %v448 = vpop.f32.mrb[0].mxu0
        %v449 = vadd.f32 %v324, %v448
        %v450 = vpop.f32.mrb[0].mxu0
        %v451 = vadd.f32 %v328, %v450
        %v452 = vpop.f32.mrb[0].mxu0
        %v453 = vadd.f32 %v324, %v452
        %v454 = vpop.f32.mrb[0].mxu0
        %v455 = vadd.f32 %v328, %v454
        %456 = vmatprep.mubr.bf16.mxu0 0
        %457 = vmatmul.mubr.bf16.gmra.mrb[0].mxu0 %v406
        %v458 = vpop.f32.mrb[0].mxu0
        %v459 = vadd.f32 %v324, %v458
        %v460 = vpop.f32.mrb[0].mxu0
        %v461 = vadd.f32 %v328, %v460
        %v462 = vpop.f32.mrb[0].mxu0
        %v463 = vadd.f32 %v324, %v462
        %v464 = vpop.f32.mrb[0].mxu0
        %v465 = vadd.f32 %v328, %v464
        %466 = vmatprep.mubr.bf16.mxu0 0
        %467 = vmatmul.mubr.bf16.gmra.mrb[0].mxu0 %v409
        %v468 = vpop.f32.mrb[0].mxu0
        %v469 = vadd.f32 %v324, %v468
        %v470 = vpop.f32.mrb[0].mxu0
        %v471 = vadd.f32 %v328, %v470
        %v472 = vpop.f32.mrb[0].mxu0
        %v473 = vadd.f32 %v324, %v472
        %v474 = vpop.f32.mrb[0].mxu0
        %v475 = vadd.f32 %v328, %v474
        %476 = vmatprep.mubr.bf16.mxu0 0
        %477 = vmatmul.mubr.bf16.gmra.mrb[0].mxu0 %v412
        %v478 = vpop.f32.mrb[0].mxu0
        %v479 = vadd.f32 %v324, %v478
        %v480 = vpop.f32.mrb[0].mxu0
        %v481 = vadd.f32 %v328, %v480
        %v482 = vpop.f32.mrb[0].mxu0
        %v483 = vadd.f32 %v324, %v482
        %v484 = vpop.f32.mrb[0].mxu0
        %v485 = vadd.f32 %v328, %v484
        %486 = vdwg.mxu0
        %487 = vmatprep.subr.bf16.mxu0 %v388
        %488 = vmatpush1.bf16.msra.mxu0 %v387
        %489 = vmatprep.subr.bf16.mxu0 %v392
        %490 = vmatpush1.bf16.msra.mxu0 %v391
        %491 = vmatprep.subr.bf16.mxu0 0
        %492 = vmatpush1.bf16.msra.mxu0 0
        %493 = vmatprep.subr.bf16.mxu0 0
        %494 = vmatpush1.bf16.msra.mxu0 0
        %495 = vmatprep.subr.bf16.mxu0 0
        %496 = vmatpush1.bf16.msra.mxu0 0
        %497 = vmatprep.subr.bf16.mxu0 0
        %498 = vmatpush1.bf16.msra.mxu0 0
        %499 = vmatprep.subr.bf16.mxu0 0
        %500 = vmatpush1.bf16.msra.mxu0 0
        %501 = vmatprep.subr.bf16.mxu0 0
        %502 = vmatpush1.bf16.msra.mxu0 0
        %503 = vmatprep.subr.bf16.mxu0 0
        %504 = vmatpush1.bf16.msra.mxu0 0
        %505 = vmatprep.subr.bf16.mxu0 0
        %506 = vmatpush1.bf16.msra.mxu0 0
        %507 = vmatprep.subr.bf16.mxu0 0
        %508 = vmatpush1.bf16.msra.mxu0 0
        %509 = vmatprep.subr.bf16.mxu0 0
        %510 = vmatpush1.bf16.msra.mxu0 0
        %511 = vmatprep.subr.bf16.mxu0 0
        %512 = vmatpush1.bf16.msra.mxu0 0
        %513 = vmatprep.subr.bf16.mxu0 0
        %514 = vmatpush1.bf16.msra.mxu0 0
        %515 = vmatprep.subr.bf16.mxu0 0
        %516 = vmatpush1.bf16.msra.mxu0 0
        %517 = vmatprep.subr.bf16.mxu0 0
        %518 = vmatpush1.bf16.msra.mxu0 0
        %519 = vmatprep.mubr.bf16.mxu0 0
        %520 = vmatmul.mubr.bf16.gmra.mrb[0].mxu0 %v403
        %v521 = vpop.f32.mrb[0].mxu0
        %v522 = vadd.f32 %v332, %v521
        %v523 = vpop.f32.mrb[0].mxu0
        %v524 = vadd.f32 %v336, %v523
        %v525 = vpop.f32.mrb[0].mxu0
        %v526 = vadd.f32 %v332, %v525
        %v527 = vpop.f32.mrb[0].mxu0
        %v528 = vadd.f32 %v336, %v527
        %529 = vmatprep.mubr.bf16.mxu0 0
        %530 = vmatmul.mubr.bf16.gmra.mrb[0].mxu0 %v406
        %v531 = vpop.f32.mrb[0].mxu0
        %v532 = vadd.f32 %v332, %v531
        %v533 = vpop.f32.mrb[0].mxu0
        %v534 = vadd.f32 %v336, %v533
        %v535 = vpop.f32.mrb[0].mxu0
        %v536 = vadd.f32 %v332, %v535
        %v537 = vpop.f32.mrb[0].mxu0
        %v538 = vadd.f32 %v336, %v537
        %539 = vmatprep.mubr.bf16.mxu0 0
        %540 = vmatmul.mubr.bf16.gmra.mrb[0].mxu0 %v409
        %v541 = vpop.f32.mrb[0].mxu0
        %v542 = vadd.f32 %v332, %v541
        %v543 = vpop.f32.mrb[0].mxu0
        %v544 = vadd.f32 %v336, %v543
        %v545 = vpop.f32.mrb[0].mxu0
        %v546 = vadd.f32 %v332, %v545
        %v547 = vpop.f32.mrb[0].mxu0
        %v548 = vadd.f32 %v336, %v547
        %549 = vmatprep.mubr.bf16.mxu0 0
        %550 = vmatmul.mubr.bf16.gmra.mrb[0].mxu0 %v412
        %v551 = vpop.f32.mrb[0].mxu0
        %v552 = vadd.f32 %v332, %v551
        %v553 = vpop.f32.mrb[0].mxu0
        %v554 = vadd.f32 %v336, %v553
        %v555 = vpop.f32.mrb[0].mxu0
        %v556 = vadd.f32 %v332, %v555
        %v557 = vpop.f32.mrb[0].mxu0
        %v558 = vadd.f32 %v336, %v557
        %559 = vdwg.mxu0
        %vm560 = vcmp.ge.f32.partialorder %v449, 0.0
        %vm561 = vcmp.ge.f32.partialorder %v451, 0.0
        %vm562 = vcmp.ge.f32.partialorder %v522, 0.0
        %vm563 = vcmp.ge.f32.partialorder %v524, 0.0
        %vm564 = vcmp.ge.f32.partialorder %v453, 0.0
        %vm565 = vcmp.ge.f32.partialorder %v455, 0.0
        %vm566 = vcmp.ge.f32.partialorder %v526, 0.0
        %vm567 = vcmp.ge.f32.partialorder %v528, 0.0
        %vm568 = vcmp.ge.f32.partialorder %v459, 0.0
        %vm569 = vcmp.ge.f32.partialorder %v461, 0.0
        %vm570 = vcmp.ge.f32.partialorder %v532, 0.0
        %vm571 = vcmp.ge.f32.partialorder %v534, 0.0
        %vm572 = vcmp.ge.f32.partialorder %v463, 0.0
        %vm573 = vcmp.ge.f32.partialorder %v465, 0.0
        %vm574 = vcmp.ge.f32.partialorder %v536, 0.0
        %vm575 = vcmp.ge.f32.partialorder %v538, 0.0
        %vm576 = vcmp.ge.f32.partialorder %v469, 0.0
        %vm577 = vcmp.ge.f32.partialorder %v471, 0.0
        %vm578 = vcmp.ge.f32.partialorder %v542, 0.0
        %vm579 = vcmp.ge.f32.partialorder %v544, 0.0
        %vm580 = vcmp.ge.f32.partialorder %v473, 0.0
        %vm581 = vcmp.ge.f32.partialorder %v475, 0.0
        %vm582 = vcmp.ge.f32.partialorder %v546, 0.0
        %vm583 = vcmp.ge.f32.partialorder %v548, 0.0
        %vm584 = vcmp.ge.f32.partialorder %v479, 0.0
        %vm585 = vcmp.ge.f32.partialorder %v481, 0.0
        %vm586 = vcmp.ge.f32.partialorder %v552, 0.0
        %vm587 = vcmp.ge.f32.partialorder %v554, 0.0
        %vm588 = vcmp.ge.f32.partialorder %v483, 0.0
        %vm589 = vcmp.ge.f32.partialorder %v485, 0.0
        %vm590 = vcmp.ge.f32.partialorder %v556, 0.0
        %vm591 = vcmp.ge.f32.partialorder %v558, 0.0
        %v592 = vmul.f32 %v449, 0.2
        %v593 = vmul.f32 %v451, 0.2
        %v594 = vmul.f32 %v522, 0.2
        %v595 = vmul.f32 %v524, 0.2
        %v596 = vmul.f32 %v453, 0.2
        %v597 = vmul.f32 %v455, 0.2
        %v598 = vmul.f32 %v526, 0.2
        %v599 = vmul.f32 %v528, 0.2
        %v600 = vmul.f32 %v459, 0.2
        %v601 = vmul.f32 %v461, 0.2
        %v602 = vmul.f32 %v532, 0.2
        %v603 = vmul.f32 %v534, 0.2
        %v604 = vmul.f32 %v463, 0.2
        %v605 = vmul.f32 %v465, 0.2
        %v606 = vmul.f32 %v536, 0.2
        %v607 = vmul.f32 %v538, 0.2
        %v608 = vmul.f32 %v469, 0.2
        %v609 = vmul.f32 %v471, 0.2
        %v610 = vmul.f32 %v542, 0.2
        %v611 = vmul.f32 %v544, 0.2
        %v612 = vmul.f32 %v473, 0.2
        %v613 = vmul.f32 %v475, 0.2
        %v614 = vmul.f32 %v546, 0.2
        %v615 = vmul.f32 %v548, 0.2
        %v616 = vmul.f32 %v479, 0.2
        %v617 = vmul.f32 %v481, 0.2
        %v618 = vmul.f32 %v552, 0.2
        %v619 = vmul.f32 %v554, 0.2
        %v620 = vmul.f32 %v483, 0.2
        %v621 = vmul.f32 %v485, 0.2
        %v622 = vmul.f32 %v556, 0.2
        %v623 = vmul.f32 %v558, 0.2
        %v624 = vsel %vm560, %v449, %v592
        %v625 = vsel %vm561, %v451, %v593
        %v626 = vsel %vm562, %v522, %v594
        %v627 = vsel %vm563, %v524, %v595
        %v628 = vsel %vm564, %v453, %v596
        %v629 = vsel %vm565, %v455, %v597
        %v630 = vsel %vm566, %v526, %v598
        %v631 = vsel %vm567, %v528, %v599
        %v632 = vsel %vm568, %v459, %v600
        %v633 = vsel %vm569, %v461, %v601
        %v634 = vsel %vm570, %v532, %v602
        %v635 = vsel %vm571, %v534, %v603
        %v636 = vsel %vm572, %v463, %v604
        %v637 = vsel %vm573, %v465, %v605
        %v638 = vsel %vm574, %v536, %v606
        %v639 = vsel %vm575, %v538, %v607
        %v640 = vsel %vm576, %v469, %v608
        %v641 = vsel %vm577, %v471, %v609
        %v642 = vsel %vm578, %v542, %v610
        %v643 = vsel %vm579, %v544, %v611
        %v644 = vsel %vm580, %v473, %v612
        %v645 = vsel %vm581, %v475, %v613
        %v646 = vsel %vm582, %v546, %v614
        %v647 = vsel %vm583, %v548, %v615
        %v648 = vsel %vm584, %v479, %v616
        %v649 = vsel %vm585, %v481, %v617
        %v650 = vsel %vm586, %v552, %v618
        %v651 = vsel %vm587, %v554, %v619
        %v652 = vsel %vm588, %v483, %v620
        %v653 = vsel %vm589, %v485, %v621
        %v654 = vsel %vm590, %v556, %v622
        %v655 = vsel %vm591, %v558, %v623
        %v656 = vpack.c.bf16 %v628, %v624
        %v657 = vpack.c.bf16 %v629, %v625
        %v658 = vpack.c.bf16 %v630, %v626
        %v659 = vpack.c.bf16 %v631, %v627
        %v660 = vpack.c.bf16 %v636, %v632
        %v661 = vpack.c.bf16 %v637, %v633
        %v662 = vpack.c.bf16 %v638, %v634
        %v663 = vpack.c.bf16 %v639, %v635
        %v664 = vpack.c.bf16 %v644, %v640
        %v665 = vpack.c.bf16 %v645, %v641
        %v666 = vpack.c.bf16 %v646, %v642
        %v667 = vpack.c.bf16 %v647, %v643
        %v668 = vpack.c.bf16 %v652, %v648
        %v669 = vpack.c.bf16 %v653, %v649
        %v670 = vpack.c.bf16 %v654, %v650
        %v671 = vpack.c.bf16 %v655, %v651
        %s672 = smul.u32 0, 4
        %s673 = smul.addr %s672, 8
        %s674 = scalar_lea.vmem [#allocation2], %s673
        %675 = vst [vmem:[%s674] sm:$0xff] %v656
        %676 = vst [vmem:[%s674 + $0x8] sm:$0xff] %v657
        %677 = vst [vmem:[%s674 + $0x10] sm:$0xff] %v658
        %678 = vst [vmem:[%s674 + $0x18] sm:$0xff] %v659
        %679 = vst [vmem:[%s674 + $0x20] sm:$0xff] %v660
        %680 = vst [vmem:[%s674 + $0x28] sm:$0xff] %v661
        %681 = vst [vmem:[%s674 + $0x30] sm:$0xff] %v662
        %682 = vst [vmem:[%s674 + $0x38] sm:$0xff] %v663
        %683 = vst [vmem:[%s674 + $0x40] sm:$0xff] %v664
        %684 = vst [vmem:[%s674 + $0x48] sm:$0xff] %v665
        %685 = vst [vmem:[%s674 + $0x50] sm:$0xff] %v666
        %686 = vst [vmem:[%s674 + $0x58] sm:$0xff] %v667
        %687 = vst [vmem:[%s674 + $0x60] sm:$0xff] %v668
        %688 = vst [vmem:[%s674 + $0x68] sm:$0xff] %v669
        %689 = vst [vmem:[%s674 + $0x70] sm:$0xff] %v670
        %690 = vst [vmem:[%s674 + $0x78] sm:$0xff] %v671
        %s691 = scalar_lea.vmem %s291, 32
        %v692 = vld [vmem:[%s691] sm:$0xf]
        %v693 = vld [vmem:[%s691 + $0x4] sm:$0xf]
        %v694 = vld [vmem:[%s691 + $0x8] sm:$0xf]
        %v695 = vld [vmem:[%s691 + $0xc] sm:$0xf]
        %v696 = vld [vmem:[%s691 + $0x10] sm:$0xf]
        %v697 = vld [vmem:[%s691 + $0x14] sm:$0xf]
        %v698 = vld [vmem:[%s691 + $0x18] sm:$0xf]
        %v699 = vld [vmem:[%s691 + $0x1c] sm:$0xf]
        %v700 = vld [vmem:[%s1] sm:$0xff]
        %v701 = vld [vmem:[%s1 + $0x8] sm:$0xff]
        %v702 = vld [vmem:[%s1 + $0x10] sm:$0xff]
        %v703 = vld [vmem:[%s1 + $0x18] sm:$0xff]
        %v704 = vld [vmem:[%s1 + $0x20] sm:$0xff]
        %v705 = vld [vmem:[%s1 + $0x28] sm:$0xff]
        %v706 = vld [vmem:[%s1 + $0x30] sm:$0xff]
        %v707 = vld [vmem:[%s1 + $0x38] sm:$0xff]
        %v716 = vunpack.c.l.b16 %v692
        %v717 = vunpack.c.l.b16 %v693
        %v718 = vunpack.c.l.b16 %v694
        %v719 = vunpack.c.l.b16 %v695
        %v720 = vunpack.c.l.b16 %v696
        %v721 = vunpack.c.l.b16 %v697
        %v722 = vunpack.c.l.b16 %v698
        %v723 = vunpack.c.l.b16 %v699
        %v724 = vpack.c.b16 %v717, %v716
        %v725 = vpack.c.b16 %v719, %v718
        %v726 = vpack.c.b16 %v721, %v720
        %v727 = vpack.c.b16 %v723, %v722
        %v736 = vunpack.c.l.b16 %v700
        %v737 = vunpack.c.h.b16 %v700
        %v738 = vunpack.c.l.b16 %v701
        %v739 = vunpack.c.h.b16 %v701
        %v740 = vunpack.c.l.b16 %v702
        %v741 = vunpack.c.h.b16 %v702
        %v742 = vunpack.c.l.b16 %v703
        %v743 = vunpack.c.h.b16 %v703
        %v744 = vunpack.c.l.b16 %v704
        %v745 = vunpack.c.h.b16 %v704
        %v746 = vunpack.c.l.b16 %v705
        %v747 = vunpack.c.h.b16 %v705
        %v748 = vunpack.c.l.b16 %v706
        %v749 = vunpack.c.h.b16 %v706
        %v750 = vunpack.c.l.b16 %v707
        %v751 = vunpack.c.h.b16 %v707
        %v752 = vpack.c.b16 %v740, %v736
        %v753 = vpack.c.b16 %v741, %v737
        %v754 = vpack.c.b16 %v742, %v738
        %v755 = vpack.c.b16 %v743, %v739
        %v756 = vpack.c.b16 %v748, %v744
        %v757 = vpack.c.b16 %v749, %v745
        %v758 = vpack.c.b16 %v750, %v746
        %v759 = vpack.c.b16 %v751, %v747
        %v769 = vsel %vm401, %v724, 0
        %v772 = vsel %vm401, %v725, 0
        %v775 = vsel %vm401, %v726, 0
        %v778 = vsel %vm401, %v727, 0
        %780 = vmatprep.subr.bf16.mxu0 %v753
        %781 = vmatpush1.bf16.msra.mxu0 %v752
        %782 = vmatprep.subr.bf16.mxu0 %v757
        %783 = vmatpush1.bf16.msra.mxu0 %v756
        %784 = vmatprep.subr.bf16.mxu0 0
        %785 = vmatpush1.bf16.msra.mxu0 0
        %786 = vmatprep.subr.bf16.mxu0 0
        %787 = vmatpush1.bf16.msra.mxu0 0
        %788 = vmatprep.subr.bf16.mxu0 0
        %789 = vmatpush1.bf16.msra.mxu0 0
        %790 = vmatprep.subr.bf16.mxu0 0
        %791 = vmatpush1.bf16.msra.mxu0 0
        %792 = vmatprep.subr.bf16.mxu0 0
        %793 = vmatpush1.bf16.msra.mxu0 0
        %794 = vmatprep.subr.bf16.mxu0 0
        %795 = vmatpush1.bf16.msra.mxu0 0
        %796 = vmatprep.subr.bf16.mxu0 0
        %797 = vmatpush1.bf16.msra.mxu0 0
        %798 = vmatprep.subr.bf16.mxu0 0
        %799 = vmatpush1.bf16.msra.mxu0 0
        %800 = vmatprep.subr.bf16.mxu0 0
        %801 = vmatpush1.bf16.msra.mxu0 0
        %802 = vmatprep.subr.bf16.mxu0 0
        %803 = vmatpush1.bf16.msra.mxu0 0
        %804 = vmatprep.subr.bf16.mxu0 0
        %805 = vmatpush1.bf16.msra.mxu0 0
        %806 = vmatprep.subr.bf16.mxu0 0
        %807 = vmatpush1.bf16.msra.mxu0 0
        %808 = vmatprep.subr.bf16.mxu0 0
        %809 = vmatpush1.bf16.msra.mxu0 0
        %810 = vmatprep.subr.bf16.mxu0 0
        %811 = vmatpush1.bf16.msra.mxu0 0
        %812 = vmatprep.mubr.bf16.mxu0 0
        %813 = vmatmul.mubr.bf16.gmra.mrb[0].mxu0 %v769
        %v814 = vpop.f32.mrb[0].mxu0
        %v815 = vadd.f32 %v324, %v814
        %v816 = vpop.f32.mrb[0].mxu0
        %v817 = vadd.f32 %v328, %v816
        %v818 = vpop.f32.mrb[0].mxu0
        %v819 = vadd.f32 %v324, %v818
        %v820 = vpop.f32.mrb[0].mxu0
        %v821 = vadd.f32 %v328, %v820
        %822 = vmatprep.mubr.bf16.mxu0 0
        %823 = vmatmul.mubr.bf16.gmra.mrb[0].mxu0 %v772
        %v824 = vpop.f32.mrb[0].mxu0
        %v825 = vadd.f32 %v324, %v824
        %v826 = vpop.f32.mrb[0].mxu0
        %v827 = vadd.f32 %v328, %v826
        %v828 = vpop.f32.mrb[0].mxu0
        %v829 = vadd.f32 %v324, %v828
        %v830 = vpop.f32.mrb[0].mxu0
        %v831 = vadd.f32 %v328, %v830
        %832 = vmatprep.mubr.bf16.mxu0 0
        %833 = vmatmul.mubr.bf16.gmra.mrb[0].mxu0 %v775
        %v834 = vpop.f32.mrb[0].mxu0
        %v835 = vadd.f32 %v324, %v834
        %v836 = vpop.f32.mrb[0].mxu0
        %v837 = vadd.f32 %v328, %v836
        %v838 = vpop.f32.mrb[0].mxu0
        %v839 = vadd.f32 %v324, %v838
        %v840 = vpop.f32.mrb[0].mxu0
        %v841 = vadd.f32 %v328, %v840
        %842 = vmatprep.mubr.bf16.mxu0 0
        %843 = vmatmul.mubr.bf16.gmra.mrb[0].mxu0 %v778
        %v844 = vpop.f32.mrb[0].mxu0
        %v845 = vadd.f32 %v324, %v844
        %v846 = vpop.f32.mrb[0].mxu0
        %v847 = vadd.f32 %v328, %v846
        %v848 = vpop.f32.mrb[0].mxu0
        %v849 = vadd.f32 %v324, %v848
        %v850 = vpop.f32.mrb[0].mxu0
        %v851 = vadd.f32 %v328, %v850
        %852 = vdwg.mxu0
        %853 = vmatprep.subr.bf16.mxu0 %v755
        %854 = vmatpush1.bf16.msra.mxu0 %v754
        %855 = vmatprep.subr.bf16.mxu0 %v759
        %856 = vmatpush1.bf16.msra.mxu0 %v758
        %857 = vmatprep.subr.bf16.mxu0 0
        %858 = vmatpush1.bf16.msra.mxu0 0
        %859 = vmatprep.subr.bf16.mxu0 0
        %860 = vmatpush1.bf16.msra.mxu0 0
        %861 = vmatprep.subr.bf16.mxu0 0
        %862 = vmatpush1.bf16.msra.mxu0 0
        %863 = vmatprep.subr.bf16.mxu0 0
        %864 = vmatpush1.bf16.msra.mxu0 0
        %865 = vmatprep.subr.bf16.mxu0 0
        %866 = vmatpush1.bf16.msra.mxu0 0
        %867 = vmatprep.subr.bf16.mxu0 0
        %868 = vmatpush1.bf16.msra.mxu0 0
        %869 = vmatprep.subr.bf16.mxu0 0
        %870 = vmatpush1.bf16.msra.mxu0 0
        %871 = vmatprep.subr.bf16.mxu0 0
        %872 = vmatpush1.bf16.msra.mxu0 0
        %873 = vmatprep.subr.bf16.mxu0 0
        %874 = vmatpush1.bf16.msra.mxu0 0
        %875 = vmatprep.subr.bf16.mxu0 0
        %876 = vmatpush1.bf16.msra.mxu0 0
        %877 = vmatprep.subr.bf16.mxu0 0
        %878 = vmatpush1.bf16.msra.mxu0 0
        %879 = vmatprep.subr.bf16.mxu0 0
        %880 = vmatpush1.bf16.msra.mxu0 0
        %881 = vmatprep.subr.bf16.mxu0 0
        %882 = vmatpush1.bf16.msra.mxu0 0
        %883 = vmatprep.subr.bf16.mxu0 0
        %884 = vmatpush1.bf16.msra.mxu0 0
        %885 = vmatprep.mubr.bf16.mxu0 0
        %886 = vmatmul.mubr.bf16.gmra.mrb[0].mxu0 %v769
        %v887 = vpop.f32.mrb[0].mxu0
        %v888 = vadd.f32 %v332, %v887
        %v889 = vpop.f32.mrb[0].mxu0
        %v890 = vadd.f32 %v336, %v889
        %v891 = vpop.f32.mrb[0].mxu0
        %v892 = vadd.f32 %v332, %v891
        %v893 = vpop.f32.mrb[0].mxu0
        %v894 = vadd.f32 %v336, %v893
        %895 = vmatprep.mubr.bf16.mxu0 0
        %896 = vmatmul.mubr.bf16.gmra.mrb[0].mxu0 %v772
        %v897 = vpop.f32.mrb[0].mxu0
        %v898 = vadd.f32 %v332, %v897
        %v899 = vpop.f32.mrb[0].mxu0
        %v900 = vadd.f32 %v336, %v899
        %v901 = vpop.f32.mrb[0].mxu0
        %v902 = vadd.f32 %v332, %v901
        %v903 = vpop.f32.mrb[0].mxu0
        %v904 = vadd.f32 %v336, %v903
        %905 = vmatprep.mubr.bf16.mxu0 0
        %906 = vmatmul.mubr.bf16.gmra.mrb[0].mxu0 %v775
        %v907 = vpop.f32.mrb[0].mxu0
        %v908 = vadd.f32 %v332, %v907
        %v909 = vpop.f32.mrb[0].mxu0
        %v910 = vadd.f32 %v336, %v909
        %v911 = vpop.f32.mrb[0].mxu0
        %v912 = vadd.f32 %v332, %v911
        %v913 = vpop.f32.mrb[0].mxu0
        %v914 = vadd.f32 %v336, %v913
        %915 = vmatprep.mubr.bf16.mxu0 0
        %916 = vmatmul.mubr.bf16.gmra.mrb[0].mxu0 %v778
        %v917 = vpop.f32.mrb[0].mxu0
        %v918 = vadd.f32 %v332, %v917
        %v919 = vpop.f32.mrb[0].mxu0
        %v920 = vadd.f32 %v336, %v919
        %v921 = vpop.f32.mrb[0].mxu0
        %v922 = vadd.f32 %v332, %v921
        %v923 = vpop.f32.mrb[0].mxu0
        %v924 = vadd.f32 %v336, %v923
        %925 = vdwg.mxu0
        %vm926 = vcmp.ge.f32.partialorder %v815, 0.0
        %vm927 = vcmp.ge.f32.partialorder %v817, 0.0
        %vm928 = vcmp.ge.f32.partialorder %v888, 0.0
        %vm929 = vcmp.ge.f32.partialorder %v890, 0.0
        %vm930 = vcmp.ge.f32.partialorder %v819, 0.0
        %vm931 = vcmp.ge.f32.partialorder %v821, 0.0
        %vm932 = vcmp.ge.f32.partialorder %v892, 0.0
        %vm933 = vcmp.ge.f32.partialorder %v894, 0.0
        %vm934 = vcmp.ge.f32.partialorder %v825, 0.0
        %vm935 = vcmp.ge.f32.partialorder %v827, 0.0
        %vm936 = vcmp.ge.f32.partialorder %v898, 0.0
        %vm937 = vcmp.ge.f32.partialorder %v900, 0.0
        %vm938 = vcmp.ge.f32.partialorder %v829, 0.0
        %vm939 = vcmp.ge.f32.partialorder %v831, 0.0
        %vm940 = vcmp.ge.f32.partialorder %v902, 0.0
        %vm941 = vcmp.ge.f32.partialorder %v904, 0.0
        %vm942 = vcmp.ge.f32.partialorder %v835, 0.0
        %vm943 = vcmp.ge.f32.partialorder %v837, 0.0
        %vm944 = vcmp.ge.f32.partialorder %v908, 0.0
        %vm945 = vcmp.ge.f32.partialorder %v910, 0.0
        %vm946 = vcmp.ge.f32.partialorder %v839, 0.0
        %vm947 = vcmp.ge.f32.partialorder %v841, 0.0
        %vm948 = vcmp.ge.f32.partialorder %v912, 0.0
        %vm949 = vcmp.ge.f32.partialorder %v914, 0.0
        %vm950 = vcmp.ge.f32.partialorder %v845, 0.0
        %vm951 = vcmp.ge.f32.partialorder %v847, 0.0
        %vm952 = vcmp.ge.f32.partialorder %v918, 0.0
        %vm953 = vcmp.ge.f32.partialorder %v920, 0.0
        %vm954 = vcmp.ge.f32.partialorder %v849, 0.0
        %vm955 = vcmp.ge.f32.partialorder %v851, 0.0
        %vm956 = vcmp.ge.f32.partialorder %v922, 0.0
        %vm957 = vcmp.ge.f32.partialorder %v924, 0.0
        %v958 = vmul.f32 %v815, 0.2
        %v959 = vmul.f32 %v817, 0.2
        %v960 = vmul.f32 %v888, 0.2
        %v961 = vmul.f32 %v890, 0.2
        %v962 = vmul.f32 %v819, 0.2
        %v963 = vmul.f32 %v821, 0.2
        %v964 = vmul.f32 %v892, 0.2
        %v965 = vmul.f32 %v894, 0.2
        %v966 = vmul.f32 %v825, 0.2
        %v967 = vmul.f32 %v827, 0.2
        %v968 = vmul.f32 %v898, 0.2
        %v969 = vmul.f32 %v900, 0.2
        %v970 = vmul.f32 %v829, 0.2
        %v971 = vmul.f32 %v831, 0.2
        %v972 = vmul.f32 %v902, 0.2
        %v973 = vmul.f32 %v904, 0.2
        %v974 = vmul.f32 %v835, 0.2
        %v975 = vmul.f32 %v837, 0.2
        %v976 = vmul.f32 %v908, 0.2
        %v977 = vmul.f32 %v910, 0.2
        %v978 = vmul.f32 %v839, 0.2
        %v979 = vmul.f32 %v841, 0.2
        %v980 = vmul.f32 %v912, 0.2
        %v981 = vmul.f32 %v914, 0.2
        %v982 = vmul.f32 %v845, 0.2
        %v983 = vmul.f32 %v847, 0.2
        %v984 = vmul.f32 %v918, 0.2
        %v985 = vmul.f32 %v920, 0.2
        %v986 = vmul.f32 %v849, 0.2
        %v987 = vmul.f32 %v851, 0.2
        %v988 = vmul.f32 %v922, 0.2
        %v989 = vmul.f32 %v924, 0.2
        %v990 = vsel %vm926, %v815, %v958
        %v991 = vsel %vm927, %v817, %v959
        %v992 = vsel %vm928, %v888, %v960
        %v993 = vsel %vm929, %v890, %v961
        %v994 = vsel %vm930, %v819, %v962
        %v995 = vsel %vm931, %v821, %v963
        %v996 = vsel %vm932, %v892, %v964
        %v997 = vsel %vm933, %v894, %v965
        %v998 = vsel %vm934, %v825, %v966
        %v999 = vsel %vm935, %v827, %v967
        %v1000 = vsel %vm936, %v898, %v968
        %v1001 = vsel %vm937, %v900, %v969
        %v1002 = vsel %vm938, %v829, %v970
        %v1003 = vsel %vm939, %v831, %v971
        %v1004 = vsel %vm940, %v902, %v972
        %v1005 = vsel %vm941, %v904, %v973
        %v1006 = vsel %vm942, %v835, %v974
        %v1007 = vsel %vm943, %v837, %v975
        %v1008 = vsel %vm944, %v908, %v976
        %v1009 = vsel %vm945, %v910, %v977
        %v1010 = vsel %vm946, %v839, %v978
        %v1011 = vsel %vm947, %v841, %v979
        %v1012 = vsel %vm948, %v912, %v980
        %v1013 = vsel %vm949, %v914, %v981
        %v1014 = vsel %vm950, %v845, %v982
        %v1015 = vsel %vm951, %v847, %v983
        %v1016 = vsel %vm952, %v918, %v984
        %v1017 = vsel %vm953, %v920, %v985
        %v1018 = vsel %vm954, %v849, %v986
        %v1019 = vsel %vm955, %v851, %v987
        %v1020 = vsel %vm956, %v922, %v988
        %v1021 = vsel %vm957, %v924, %v989
        %v1022 = vpack.c.bf16 %v994, %v990
        %v1023 = vpack.c.bf16 %v995, %v991
        %v1024 = vpack.c.bf16 %v996, %v992
        %v1025 = vpack.c.bf16 %v997, %v993
        %v1026 = vpack.c.bf16 %v1002, %v998
        %v1027 = vpack.c.bf16 %v1003, %v999
        %v1028 = vpack.c.bf16 %v1004, %v1000
        %v1029 = vpack.c.bf16 %v1005, %v1001
        %v1030 = vpack.c.bf16 %v1010, %v1006
        %v1031 = vpack.c.bf16 %v1011, %v1007
        %v1032 = vpack.c.bf16 %v1012, %v1008
        %v1033 = vpack.c.bf16 %v1013, %v1009
        %v1034 = vpack.c.bf16 %v1018, %v1014
        %v1035 = vpack.c.bf16 %v1019, %v1015
        %v1036 = vpack.c.bf16 %v1020, %v1016
        %v1037 = vpack.c.bf16 %v1021, %v1017
        %s1038 = smul.u32 4, 4
        %s1039 = smul.addr %s1038, 8
        %s1040 = scalar_lea.vmem [#allocation2], %s1039
        %1041 = vst [vmem:[%s1040] sm:$0xff] %v1022
        %1042 = vst [vmem:[%s1040 + $0x8] sm:$0xff] %v1023
        %1043 = vst [vmem:[%s1040 + $0x10] sm:$0xff] %v1024
        %1044 = vst [vmem:[%s1040 + $0x18] sm:$0xff] %v1025
        %1045 = vst [vmem:[%s1040 + $0x20] sm:$0xff] %v1026
        %1046 = vst [vmem:[%s1040 + $0x28] sm:$0xff] %v1027
        %1047 = vst [vmem:[%s1040 + $0x30] sm:$0xff] %v1028
        %1048 = vst [vmem:[%s1040 + $0x38] sm:$0xff] %v1029
        %1049 = vst [vmem:[%s1040 + $0x40] sm:$0xff] %v1030
        %1050 = vst [vmem:[%s1040 + $0x48] sm:$0xff] %v1031
        %1051 = vst [vmem:[%s1040 + $0x50] sm:$0xff] %v1032
        %1052 = vst [vmem:[%s1040 + $0x58] sm:$0xff] %v1033
        %1053 = vst [vmem:[%s1040 + $0x60] sm:$0xff] %v1034
        %1054 = vst [vmem:[%s1040 + $0x68] sm:$0xff] %v1035
        %1055 = vst [vmem:[%s1040 + $0x70] sm:$0xff] %v1036
        %1056 = vst [vmem:[%s1040 + $0x78] sm:$0xff] %v1037
        %v1057 = vld [vmem:[%s674] sm:$0xff]
        %v1058 = vld [vmem:[%s674 + $0x8] sm:$0xff]
        %v1059 = vld [vmem:[%s674 + $0x10] sm:$0xff]
        %v1060 = vld [vmem:[%s674 + $0x18] sm:$0xff]
        %v1061 = vld [vmem:[%s674 + $0x20] sm:$0xff]
        %v1062 = vld [vmem:[%s674 + $0x28] sm:$0xff]
        %v1063 = vld [vmem:[%s674 + $0x30] sm:$0xff]
        %v1064 = vld [vmem:[%s674 + $0x38] sm:$0xff]
        %v1065 = vld [vmem:[%s674 + $0x40] sm:$0xff]
        %v1066 = vld [vmem:[%s674 + $0x48] sm:$0xff]
        %v1067 = vld [vmem:[%s674 + $0x50] sm:$0xff]
        %v1068 = vld [vmem:[%s674 + $0x58] sm:$0xff]
        %v1069 = vld [vmem:[%s674 + $0x60] sm:$0xff]
        %v1070 = vld [vmem:[%s674 + $0x68] sm:$0xff]
        %v1071 = vld [vmem:[%s674 + $0x70] sm:$0xff]
        %v1072 = vld [vmem:[%s674 + $0x78] sm:$0xff]
        %v1073 = vld [vmem:[#allocation4] sm:$0xff]
        %v1074 = vld [vmem:[#allocation4 + $0x8] sm:$0xff]
        %v1075 = vld [vmem:[#allocation4 + $0x10] sm:$0xff]
        %v1076 = vld [vmem:[#allocation4 + $0x18] sm:$0xff]
        %v1077 = vld [vmem:[#allocation4 + $0x20] sm:$0xff]
        %v1078 = vld [vmem:[#allocation4 + $0x28] sm:$0xff]
        %v1079 = vld [vmem:[#allocation4 + $0x30] sm:$0xff]
        %v1080 = vld [vmem:[#allocation4 + $0x38] sm:$0xff]
        %v1081 = vld [vmem:[#allocation4 + $0x40] sm:$0xff]
        %v1082 = vld [vmem:[#allocation4 + $0x48] sm:$0xff]
        %v1083 = vld [vmem:[#allocation4 + $0x50] sm:$0xff]
        %v1084 = vld [vmem:[#allocation4 + $0x58] sm:$0xff]
        %v1085 = vld [vmem:[#allocation4 + $0x60] sm:$0xff]
        %v1086 = vld [vmem:[#allocation4 + $0x68] sm:$0xff]
        %v1087 = vld [vmem:[#allocation4 + $0x70] sm:$0xff]
        %v1088 = vld [vmem:[#allocation4 + $0x78] sm:$0xff]
        %v1089 = vld [vmem:[#allocation4 + $0x80] sm:$0xff]
        %v1090 = vld [vmem:[#allocation4 + $0x88] sm:$0xff]
        %v1091 = vld [vmem:[#allocation4 + $0x90] sm:$0xff]
        %v1092 = vld [vmem:[#allocation4 + $0x98] sm:$0xff]
        %v1093 = vld [vmem:[#allocation4 + $0xa0] sm:$0xff]
        %v1094 = vld [vmem:[#allocation4 + $0xa8] sm:$0xff]
        %v1095 = vld [vmem:[#allocation4 + $0xb0] sm:$0xff]
        %v1096 = vld [vmem:[#allocation4 + $0xb8] sm:$0xff]
        %v1097 = vld [vmem:[#allocation4 + $0xc0] sm:$0xff]
        %v1098 = vld [vmem:[#allocation4 + $0xc8] sm:$0xff]
        %v1099 = vld [vmem:[#allocation4 + $0xd0] sm:$0xff]
        %v1100 = vld [vmem:[#allocation4 + $0xd8] sm:$0xff]
        %v1101 = vld [vmem:[#allocation4 + $0xe0] sm:$0xff]
        %v1102 = vld [vmem:[#allocation4 + $0xe8] sm:$0xff]
        %v1103 = vld [vmem:[#allocation4 + $0xf0] sm:$0xff]
        %v1104 = vld [vmem:[#allocation4 + $0xf8] sm:$0xff]
        %v1105 = vld [vmem:[#allocation4 + $0x100] sm:$0xff]
        %v1106 = vld [vmem:[#allocation4 + $0x108] sm:$0xff]
        %v1107 = vld [vmem:[#allocation4 + $0x110] sm:$0xff]
        %v1108 = vld [vmem:[#allocation4 + $0x118] sm:$0xff]
        %v1109 = vld [vmem:[#allocation4 + $0x120] sm:$0xff]
        %v1110 = vld [vmem:[#allocation4 + $0x128] sm:$0xff]
        %v1111 = vld [vmem:[#allocation4 + $0x130] sm:$0xff]
        %v1112 = vld [vmem:[#allocation4 + $0x138] sm:$0xff]
        %v1113 = vld [vmem:[#allocation4 + $0x140] sm:$0xff]
        %v1114 = vld [vmem:[#allocation4 + $0x148] sm:$0xff]
        %v1115 = vld [vmem:[#allocation4 + $0x150] sm:$0xff]
        %v1116 = vld [vmem:[#allocation4 + $0x158] sm:$0xff]
        %v1117 = vld [vmem:[#allocation4 + $0x160] sm:$0xff]
        %v1118 = vld [vmem:[#allocation4 + $0x168] sm:$0xff]
        %v1119 = vld [vmem:[#allocation4 + $0x170] sm:$0xff]
        %v1120 = vld [vmem:[#allocation4 + $0x178] sm:$0xff]
        %v1121 = vld [vmem:[#allocation4 + $0x180] sm:$0xff]
        %v1122 = vld [vmem:[#allocation4 + $0x188] sm:$0xff]
        %v1123 = vld [vmem:[#allocation4 + $0x190] sm:$0xff]
        %v1124 = vld [vmem:[#allocation4 + $0x198] sm:$0xff]
        %v1125 = vld [vmem:[#allocation4 + $0x1a0] sm:$0xff]
        %v1126 = vld [vmem:[#allocation4 + $0x1a8] sm:$0xff]
        %v1127 = vld [vmem:[#allocation4 + $0x1b0] sm:$0xff]
        %v1128 = vld [vmem:[#allocation4 + $0x1b8] sm:$0xff]
        %v1129 = vld [vmem:[#allocation4 + $0x1c0] sm:$0xff]
        %v1130 = vld [vmem:[#allocation4 + $0x1c8] sm:$0xff]
        %v1131 = vld [vmem:[#allocation4 + $0x1d0] sm:$0xff]
        %v1132 = vld [vmem:[#allocation4 + $0x1d8] sm:$0xff]
        %v1133 = vld [vmem:[#allocation4 + $0x1e0] sm:$0xff]
        %v1134 = vld [vmem:[#allocation4 + $0x1e8] sm:$0xff]
        %v1135 = vld [vmem:[#allocation4 + $0x1f0] sm:$0xff]
        %v1136 = vld [vmem:[#allocation4 + $0x1f8] sm:$0xff]
        %v1138 = vlaneseq
        %v1139 = vshrl.u32 %v1138, 7
        %v1140 = vsub.s32 0, %v1139
        %v1141 = vrot.slane %v301, %v1140
        %v1142 = vlaneseq
        %v1143 = vshrl.u32 %v1142, 7
        %v1144 = vsub.s32 1, %v1143
        %v1145 = vrot.slane %v301, %v1144
        %v1212 = vunpack.c.l.b16 %v1073
        %v1213 = vunpack.c.h.b16 %v1073
        %v1214 = vunpack.c.l.b16 %v1074
        %v1215 = vunpack.c.h.b16 %v1074
        %v1216 = vunpack.c.l.b16 %v1075
        %v1217 = vunpack.c.h.b16 %v1075
        %v1218 = vunpack.c.l.b16 %v1076
        %v1219 = vunpack.c.h.b16 %v1076
        %v1220 = vunpack.c.l.b16 %v1077
        %v1221 = vunpack.c.h.b16 %v1077
        %v1222 = vunpack.c.l.b16 %v1078
        %v1223 = vunpack.c.h.b16 %v1078
        %v1224 = vunpack.c.l.b16 %v1079
        %v1225 = vunpack.c.h.b16 %v1079
        %v1226 = vunpack.c.l.b16 %v1080
        %v1227 = vunpack.c.h.b16 %v1080
        %v1228 = vunpack.c.l.b16 %v1081
        %v1229 = vunpack.c.h.b16 %v1081
        %v1230 = vunpack.c.l.b16 %v1082
        %v1231 = vunpack.c.h.b16 %v1082
        %v1232 = vunpack.c.l.b16 %v1083
        %v1233 = vunpack.c.h.b16 %v1083
        %v1234 = vunpack.c.l.b16 %v1084
        %v1235 = vunpack.c.h.b16 %v1084
        %v1236 = vunpack.c.l.b16 %v1085
        %v1237 = vunpack.c.h.b16 %v1085
        %v1238 = vunpack.c.l.b16 %v1086
        %v1239 = vunpack.c.h.b16 %v1086
        %v1240 = vunpack.c.l.b16 %v1087
        %v1241 = vunpack.c.h.b16 %v1087
        %v1242 = vunpack.c.l.b16 %v1088
        %v1243 = vunpack.c.h.b16 %v1088
        %v1244 = vunpack.c.l.b16 %v1089
        %v1245 = vunpack.c.h.b16 %v1089
        %v1246 = vunpack.c.l.b16 %v1090
        %v1247 = vunpack.c.h.b16 %v1090
        %v1248 = vunpack.c.l.b16 %v1091
        %v1249 = vunpack.c.h.b16 %v1091
        %v1250 = vunpack.c.l.b16 %v1092
        %v1251 = vunpack.c.h.b16 %v1092
        %v1252 = vunpack.c.l.b16 %v1093
        %v1253 = vunpack.c.h.b16 %v1093
        %v1254 = vunpack.c.l.b16 %v1094
        %v1255 = vunpack.c.h.b16 %v1094
        %v1256 = vunpack.c.l.b16 %v1095
        %v1257 = vunpack.c.h.b16 %v1095
        %v1258 = vunpack.c.l.b16 %v1096
        %v1259 = vunpack.c.h.b16 %v1096
        %v1260 = vunpack.c.l.b16 %v1097
        %v1261 = vunpack.c.h.b16 %v1097
        %v1262 = vunpack.c.l.b16 %v1098
        %v1263 = vunpack.c.h.b16 %v1098
        %v1264 = vunpack.c.l.b16 %v1099
        %v1265 = vunpack.c.h.b16 %v1099
        %v1266 = vunpack.c.l.b16 %v1100
        %v1267 = vunpack.c.h.b16 %v1100
        %v1268 = vunpack.c.l.b16 %v1101
        %v1269 = vunpack.c.h.b16 %v1101
        %v1270 = vunpack.c.l.b16 %v1102
        %v1271 = vunpack.c.h.b16 %v1102
        %v1272 = vunpack.c.l.b16 %v1103
        %v1273 = vunpack.c.h.b16 %v1103
        %v1274 = vunpack.c.l.b16 %v1104
        %v1275 = vunpack.c.h.b16 %v1104
        %v1276 = vunpack.c.l.b16 %v1105
        %v1277 = vunpack.c.h.b16 %v1105
        %v1278 = vunpack.c.l.b16 %v1106
        %v1279 = vunpack.c.h.b16 %v1106
        %v1280 = vunpack.c.l.b16 %v1107
        %v1281 = vunpack.c.h.b16 %v1107
        %v1282 = vunpack.c.l.b16 %v1108
        %v1283 = vunpack.c.h.b16 %v1108
        %v1284 = vunpack.c.l.b16 %v1109
        %v1285 = vunpack.c.h.b16 %v1109
        %v1286 = vunpack.c.l.b16 %v1110
        %v1287 = vunpack.c.h.b16 %v1110
        %v1288 = vunpack.c.l.b16 %v1111
        %v1289 = vunpack.c.h.b16 %v1111
        %v1290 = vunpack.c.l.b16 %v1112
        %v1291 = vunpack.c.h.b16 %v1112
        %v1292 = vunpack.c.l.b16 %v1113
        %v1293 = vunpack.c.h.b16 %v1113
        %v1294 = vunpack.c.l.b16 %v1114
        %v1295 = vunpack.c.h.b16 %v1114
        %v1296 = vunpack.c.l.b16 %v1115
        %v1297 = vunpack.c.h.b16 %v1115
        %v1298 = vunpack.c.l.b16 %v1116
        %v1299 = vunpack.c.h.b16 %v1116
        %v1300 = vunpack.c.l.b16 %v1117
        %v1301 = vunpack.c.h.b16 %v1117
        %v1302 = vunpack.c.l.b16 %v1118
        %v1303 = vunpack.c.h.b16 %v1118
        %v1304 = vunpack.c.l.b16 %v1119
        %v1305 = vunpack.c.h.b16 %v1119
        %v1306 = vunpack.c.l.b16 %v1120
        %v1307 = vunpack.c.h.b16 %v1120
        %v1308 = vunpack.c.l.b16 %v1121
        %v1309 = vunpack.c.h.b16 %v1121
        %v1310 = vunpack.c.l.b16 %v1122
        %v1311 = vunpack.c.h.b16 %v1122
        %v1312 = vunpack.c.l.b16 %v1123
        %v1313 = vunpack.c.h.b16 %v1123
        %v1314 = vunpack.c.l.b16 %v1124
        %v1315 = vunpack.c.h.b16 %v1124
        %v1316 = vunpack.c.l.b16 %v1125
        %v1317 = vunpack.c.h.b16 %v1125
        %v1318 = vunpack.c.l.b16 %v1126
        %v1319 = vunpack.c.h.b16 %v1126
        %v1320 = vunpack.c.l.b16 %v1127
        %v1321 = vunpack.c.h.b16 %v1127
        %v1322 = vunpack.c.l.b16 %v1128
        %v1323 = vunpack.c.h.b16 %v1128
        %v1324 = vunpack.c.l.b16 %v1129
        %v1325 = vunpack.c.h.b16 %v1129
        %v1326 = vunpack.c.l.b16 %v1130
        %v1327 = vunpack.c.h.b16 %v1130
        %v1328 = vunpack.c.l.b16 %v1131
        %v1329 = vunpack.c.h.b16 %v1131
        %v1330 = vunpack.c.l.b16 %v1132
        %v1331 = vunpack.c.h.b16 %v1132
        %v1332 = vunpack.c.l.b16 %v1133
        %v1333 = vunpack.c.h.b16 %v1133
        %v1334 = vunpack.c.l.b16 %v1134
        %v1335 = vunpack.c.h.b16 %v1134
        %v1336 = vunpack.c.l.b16 %v1135
        %v1337 = vunpack.c.h.b16 %v1135
        %v1338 = vunpack.c.l.b16 %v1136
        %v1339 = vunpack.c.h.b16 %v1136
        %v1340 = vpack.c.b16 %v1214, %v1212
        %v1341 = vpack.c.b16 %v1215, %v1213
        %v1342 = vpack.c.b16 %v1218, %v1216
        %v1343 = vpack.c.b16 %v1219, %v1217
        %v1344 = vpack.c.b16 %v1222, %v1220
        %v1345 = vpack.c.b16 %v1223, %v1221
        %v1346 = vpack.c.b16 %v1226, %v1224
        %v1347 = vpack.c.b16 %v1227, %v1225
        %v1348 = vpack.c.b16 %v1230, %v1228
        %v1349 = vpack.c.b16 %v1231, %v1229
        %v1350 = vpack.c.b16 %v1234, %v1232
        %v1351 = vpack.c.b16 %v1235, %v1233
        %v1352 = vpack.c.b16 %v1238, %v1236
        %v1353 = vpack.c.b16 %v1239, %v1237
        %v1354 = vpack.c.b16 %v1242, %v1240
        %v1355 = vpack.c.b16 %v1243, %v1241
        %v1356 = vpack.c.b16 %v1246, %v1244
        %v1357 = vpack.c.b16 %v1247, %v1245
        %v1358 = vpack.c.b16 %v1250, %v1248
        %v1359 = vpack.c.b16 %v1251, %v1249
        %v1360 = vpack.c.b16 %v1254, %v1252
        %v1361 = vpack.c.b16 %v1255, %v1253
        %v1362 = vpack.c.b16 %v1258, %v1256
        %v1363 = vpack.c.b16 %v1259, %v1257
        %v1364 = vpack.c.b16 %v1262, %v1260
        %v1365 = vpack.c.b16 %v1263, %v1261
        %v1366 = vpack.c.b16 %v1266, %v1264
        %v1367 = vpack.c.b16 %v1267, %v1265
        %v1368 = vpack.c.b16 %v1270, %v1268
        %v1369 = vpack.c.b16 %v1271, %v1269
        %v1370 = vpack.c.b16 %v1274, %v1272
        %v1371 = vpack.c.b16 %v1275, %v1273
        %v1372 = vpack.c.b16 %v1278, %v1276
        %v1373 = vpack.c.b16 %v1279, %v1277
        %v1374 = vpack.c.b16 %v1282, %v1280
        %v1375 = vpack.c.b16 %v1283, %v1281
        %v1376 = vpack.c.b16 %v1286, %v1284
        %v1377 = vpack.c.b16 %v1287, %v1285
        %v1378 = vpack.c.b16 %v1290, %v1288
        %v1379 = vpack.c.b16 %v1291, %v1289
        %v1380 = vpack.c.b16 %v1294, %v1292
        %v1381 = vpack.c.b16 %v1295, %v1293
        %v1382 = vpack.c.b16 %v1298, %v1296
        %v1383 = vpack.c.b16 %v1299, %v1297
        %v1384 = vpack.c.b16 %v1302, %v1300
        %v1385 = vpack.c.b16 %v1303, %v1301
        %v1386 = vpack.c.b16 %v1306, %v1304
        %v1387 = vpack.c.b16 %v1307, %v1305
        %v1388 = vpack.c.b16 %v1310, %v1308
        %v1389 = vpack.c.b16 %v1311, %v1309
        %v1390 = vpack.c.b16 %v1314, %v1312
        %v1391 = vpack.c.b16 %v1315, %v1313
        %v1392 = vpack.c.b16 %v1318, %v1316
        %v1393 = vpack.c.b16 %v1319, %v1317
        %v1394 = vpack.c.b16 %v1322, %v1320
        %v1395 = vpack.c.b16 %v1323, %v1321
        %v1396 = vpack.c.b16 %v1326, %v1324
        %v1397 = vpack.c.b16 %v1327, %v1325
        %v1398 = vpack.c.b16 %v1330, %v1328
        %v1399 = vpack.c.b16 %v1331, %v1329
        %v1400 = vpack.c.b16 %v1334, %v1332
        %v1401 = vpack.c.b16 %v1335, %v1333
        %v1402 = vpack.c.b16 %v1338, %v1336
        %v1403 = vpack.c.b16 %v1339, %v1337
        %1468 = vmatprep.subr.bf16.mxu0 %v1341
        %1469 = vmatpush1.bf16.msra.mxu0 %v1340
        %1470 = vmatprep.subr.bf16.mxu0 %v1343
        %1471 = vmatpush1.bf16.msra.mxu0 %v1342
        %1472 = vmatprep.subr.bf16.mxu0 %v1345
        %1473 = vmatpush1.bf16.msra.mxu0 %v1344
        %1474 = vmatprep.subr.bf16.mxu0 %v1347
        %1475 = vmatpush1.bf16.msra.mxu0 %v1346
        %1476 = vmatprep.subr.bf16.mxu0 %v1349
        %1477 = vmatpush1.bf16.msra.mxu0 %v1348
        %1478 = vmatprep.subr.bf16.mxu0 %v1351
        %1479 = vmatpush1.bf16.msra.mxu0 %v1350
        %1480 = vmatprep.subr.bf16.mxu0 %v1353
        %1481 = vmatpush1.bf16.msra.mxu0 %v1352
        %1482 = vmatprep.subr.bf16.mxu0 %v1355
        %1483 = vmatpush1.bf16.msra.mxu0 %v1354
        %1484 = vmatprep.subr.bf16.mxu0 %v1357
        %1485 = vmatpush1.bf16.msra.mxu0 %v1356
        %1486 = vmatprep.subr.bf16.mxu0 %v1359
        %1487 = vmatpush1.bf16.msra.mxu0 %v1358
        %1488 = vmatprep.subr.bf16.mxu0 %v1361
        %1489 = vmatpush1.bf16.msra.mxu0 %v1360
        %1490 = vmatprep.subr.bf16.mxu0 %v1363
        %1491 = vmatpush1.bf16.msra.mxu0 %v1362
        %1492 = vmatprep.subr.bf16.mxu0 %v1365
        %1493 = vmatpush1.bf16.msra.mxu0 %v1364
        %1494 = vmatprep.subr.bf16.mxu0 %v1367
        %1495 = vmatpush1.bf16.msra.mxu0 %v1366
        %1496 = vmatprep.subr.bf16.mxu0 %v1369
        %1497 = vmatpush1.bf16.msra.mxu0 %v1368
        %1498 = vmatprep.subr.bf16.mxu0 %v1371
        %1499 = vmatpush1.bf16.msra.mxu0 %v1370
        %1500 = vmatprep.mubr.bf16.mxu0 %v1058
        %1501 = vmatmul.mubr.bf16.gmra.mrb[0].mxu0 %v1057
        %v1502 = vpop.f32.mrb[0].mxu0
        %v1503 = vadd.f32 %v1141, %v1502
        %v1504 = vpop.f32.mrb[0].mxu0
        %v1505 = vadd.f32 %v1145, %v1504
        %v1506 = vpop.f32.mrb[0].mxu0
        %v1507 = vadd.f32 %v1141, %v1506
        %v1508 = vpop.f32.mrb[0].mxu0
        %v1509 = vadd.f32 %v1145, %v1508
        %1510 = vmatprep.mubr.bf16.mxu0 %v1062
        %1511 = vmatmul.mubr.bf16.gmra.mrb[0].mxu0 %v1061
        %v1512 = vpop.f32.mrb[0].mxu0
        %v1513 = vadd.f32 %v1141, %v1512
        %v1514 = vpop.f32.mrb[0].mxu0
        %v1515 = vadd.f32 %v1145, %v1514
        %v1516 = vpop.f32.mrb[0].mxu0
        %v1517 = vadd.f32 %v1141, %v1516
        %v1518 = vpop.f32.mrb[0].mxu0
        %v1519 = vadd.f32 %v1145, %v1518
        %1520 = vmatprep.mubr.bf16.mxu0 %v1066
        %1521 = vmatmul.mubr.bf16.gmra.mrb[0].mxu0 %v1065
        %v1522 = vpop.f32.mrb[0].mxu0
        %v1523 = vadd.f32 %v1141, %v1522
        %v1524 = vpop.f32.mrb[0].mxu0
        %v1525 = vadd.f32 %v1145, %v1524
        %v1526 = vpop.f32.mrb[0].mxu0
        %v1527 = vadd.f32 %v1141, %v1526
        %v1528 = vpop.f32.mrb[0].mxu0
        %v1529 = vadd.f32 %v1145, %v1528
        %1530 = vmatprep.mubr.bf16.mxu0 %v1070
        %1531 = vmatmul.mubr.bf16.gmra.mrb[0].mxu0 %v1069
        %v1532 = vpop.f32.mrb[0].mxu0
        %v1533 = vadd.f32 %v1141, %v1532
        %v1534 = vpop.f32.mrb[0].mxu0
        %v1535 = vadd.f32 %v1145, %v1534
        %v1536 = vpop.f32.mrb[0].mxu0
        %v1537 = vadd.f32 %v1141, %v1536
        %v1538 = vpop.f32.mrb[0].mxu0
        %v1539 = vadd.f32 %v1145, %v1538
        %1540 = vdwg.mxu0
        %1541 = vmatprep.subr.bf16.mxu0 %v1373
        %1542 = vmatpush1.bf16.msra.mxu0 %v1372
        %1543 = vmatprep.subr.bf16.mxu0 %v1375
        %1544 = vmatpush1.bf16.msra.mxu0 %v1374
        %1545 = vmatprep.subr.bf16.mxu0 %v1377
        %1546 = vmatpush1.bf16.msra.mxu0 %v1376
        %1547 = vmatprep.subr.bf16.mxu0 %v1379
        %1548 = vmatpush1.bf16.msra.mxu0 %v1378
        %1549 = vmatprep.subr.bf16.mxu0 %v1381
        %1550 = vmatpush1.bf16.msra.mxu0 %v1380
        %1551 = vmatprep.subr.bf16.mxu0 %v1383
        %1552 = vmatpush1.bf16.msra.mxu0 %v1382
        %1553 = vmatprep.subr.bf16.mxu0 %v1385
        %1554 = vmatpush1.bf16.msra.mxu0 %v1384
        %1555 = vmatprep.subr.bf16.mxu0 %v1387
        %1556 = vmatpush1.bf16.msra.mxu0 %v1386
        %1557 = vmatprep.subr.bf16.mxu0 %v1389
        %1558 = vmatpush1.bf16.msra.mxu0 %v1388
        %1559 = vmatprep.subr.bf16.mxu0 %v1391
        %1560 = vmatpush1.bf16.msra.mxu0 %v1390
        %1561 = vmatprep.subr.bf16.mxu0 %v1393
        %1562 = vmatpush1.bf16.msra.mxu0 %v1392
        %1563 = vmatprep.subr.bf16.mxu0 %v1395
        %1564 = vmatpush1.bf16.msra.mxu0 %v1394
        %1565 = vmatprep.subr.bf16.mxu0 %v1397
        %1566 = vmatpush1.bf16.msra.mxu0 %v1396
        %1567 = vmatprep.subr.bf16.mxu0 %v1399
        %1568 = vmatpush1.bf16.msra.mxu0 %v1398
        %1569 = vmatprep.subr.bf16.mxu0 %v1401
        %1570 = vmatpush1.bf16.msra.mxu0 %v1400
        %1571 = vmatprep.subr.bf16.mxu0 %v1403
        %1572 = vmatpush1.bf16.msra.mxu0 %v1402
        %1573 = vmatprep.mubr.bf16.mxu0 %v1060
        %1574 = vmatmul.mubr.bf16.gmra.mrb[0].mxu0 %v1059
        %v1575 = vpop.f32.mrb[0].mxu0
        %v1576 = vadd.f32 %v1503, %v1575
        %v1577 = vpop.f32.mrb[0].mxu0
        %v1578 = vadd.f32 %v1505, %v1577
        %v1579 = vpop.f32.mrb[0].mxu0
        %v1580 = vadd.f32 %v1507, %v1579
        %v1581 = vpop.f32.mrb[0].mxu0
        %v1582 = vadd.f32 %v1509, %v1581
        %1583 = vmatprep.mubr.bf16.mxu0 %v1064
        %1584 = vmatmul.mubr.bf16.gmra.mrb[0].mxu0 %v1063
        %v1585 = vpop.f32.mrb[0].mxu0
        %v1586 = vadd.f32 %v1513, %v1585
        %v1587 = vpop.f32.mrb[0].mxu0
        %v1588 = vadd.f32 %v1515, %v1587
        %v1589 = vpop.f32.mrb[0].mxu0
        %v1590 = vadd.f32 %v1517, %v1589
        %v1591 = vpop.f32.mrb[0].mxu0
        %v1592 = vadd.f32 %v1519, %v1591
        %1593 = vmatprep.mubr.bf16.mxu0 %v1068
        %1594 = vmatmul.mubr.bf16.gmra.mrb[0].mxu0 %v1067
        %v1595 = vpop.f32.mrb[0].mxu0
        %v1596 = vadd.f32 %v1523, %v1595
        %v1597 = vpop.f32.mrb[0].mxu0
        %v1598 = vadd.f32 %v1525, %v1597
        %v1599 = vpop.f32.mrb[0].mxu0
        %v1600 = vadd.f32 %v1527, %v1599
        %v1601 = vpop.f32.mrb[0].mxu0
        %v1602 = vadd.f32 %v1529, %v1601
        %1603 = vmatprep.mubr.bf16.mxu0 %v1072
        %1604 = vmatmul.mubr.bf16.gmra.mrb[0].mxu0 %v1071
        %v1605 = vpop.f32.mrb[0].mxu0
        %v1606 = vadd.f32 %v1533, %v1605
        %v1607 = vpop.f32.mrb[0].mxu0
        %v1608 = vadd.f32 %v1535, %v1607
        %v1609 = vpop.f32.mrb[0].mxu0
        %v1610 = vadd.f32 %v1537, %v1609
        %v1611 = vpop.f32.mrb[0].mxu0
        %v1612 = vadd.f32 %v1539, %v1611
        %1613 = vdwg.mxu0
        %vm1614 = vcmp.ge.f32.partialorder %v1576, 0.0
        %vm1615 = vcmp.ge.f32.partialorder %v1578, 0.0
        %vm1616 = vcmp.ge.f32.partialorder %v1580, 0.0
        %vm1617 = vcmp.ge.f32.partialorder %v1582, 0.0
        %vm1618 = vcmp.ge.f32.partialorder %v1586, 0.0
        %vm1619 = vcmp.ge.f32.partialorder %v1588, 0.0
        %vm1620 = vcmp.ge.f32.partialorder %v1590, 0.0
        %vm1621 = vcmp.ge.f32.partialorder %v1592, 0.0
        %vm1622 = vcmp.ge.f32.partialorder %v1596, 0.0
        %vm1623 = vcmp.ge.f32.partialorder %v1598, 0.0
        %vm1624 = vcmp.ge.f32.partialorder %v1600, 0.0
        %vm1625 = vcmp.ge.f32.partialorder %v1602, 0.0
        %vm1626 = vcmp.ge.f32.partialorder %v1606, 0.0
        %vm1627 = vcmp.ge.f32.partialorder %v1608, 0.0
        %vm1628 = vcmp.ge.f32.partialorder %v1610, 0.0
        %vm1629 = vcmp.ge.f32.partialorder %v1612, 0.0
        %v1630 = vmul.f32 %v1576, 0.2
        %v1631 = vmul.f32 %v1578, 0.2
        %v1632 = vmul.f32 %v1580, 0.2
        %v1633 = vmul.f32 %v1582, 0.2
        %v1634 = vmul.f32 %v1586, 0.2
        %v1635 = vmul.f32 %v1588, 0.2
        %v1636 = vmul.f32 %v1590, 0.2
        %v1637 = vmul.f32 %v1592, 0.2
        %v1638 = vmul.f32 %v1596, 0.2
        %v1639 = vmul.f32 %v1598, 0.2
        %v1640 = vmul.f32 %v1600, 0.2
        %v1641 = vmul.f32 %v1602, 0.2
        %v1642 = vmul.f32 %v1606, 0.2
        %v1643 = vmul.f32 %v1608, 0.2
        %v1644 = vmul.f32 %v1610, 0.2
        %v1645 = vmul.f32 %v1612, 0.2
        %v1646 = vsel %vm1614, %v1576, %v1630
        %v1647 = vsel %vm1615, %v1578, %v1631
        %v1648 = vsel %vm1616, %v1580, %v1632
        %v1649 = vsel %vm1617, %v1582, %v1633
        %v1650 = vsel %vm1618, %v1586, %v1634
        %v1651 = vsel %vm1619, %v1588, %v1635
        %v1652 = vsel %vm1620, %v1590, %v1636
        %v1653 = vsel %vm1621, %v1592, %v1637
        %v1654 = vsel %vm1622, %v1596, %v1638
        %v1655 = vsel %vm1623, %v1598, %v1639
        %v1656 = vsel %vm1624, %v1600, %v1640
        %v1657 = vsel %vm1625, %v1602, %v1641
        %v1658 = vsel %vm1626, %v1606, %v1642
        %v1659 = vsel %vm1627, %v1608, %v1643
        %v1660 = vsel %vm1628, %v1610, %v1644
        %v1661 = vsel %vm1629, %v1612, %v1645
        %v1663 = vlaneseq
        %v1664 = vshrl.u32 %v1663, 7
        %v1665 = vsub.s32 0, %v1664
        %v1666 = vrot.slane %v302, %v1665
        %v1667 = vlaneseq
        %v1668 = vshrl.u32 %v1667, 7
        %v1669 = vsub.s32 1, %v1668
        %v1670 = vrot.slane %v302, %v1669
        %v1673 = vmul.f32 %v1646, %v1666
        %v1674 = vmul.f32 %v1647, %v1670
        %v1675 = vmul.f32 %v1648, %v1666
        %v1676 = vmul.f32 %v1649, %v1670
        %v1677 = vmul.f32 %v1650, %v1666
        %v1678 = vmul.f32 %v1651, %v1670
        %v1679 = vmul.f32 %v1652, %v1666
        %v1680 = vmul.f32 %v1653, %v1670
        %v1681 = vmul.f32 %v1654, %v1666
        %v1682 = vmul.f32 %v1655, %v1670
        %v1683 = vmul.f32 %v1656, %v1666
        %v1684 = vmul.f32 %v1657, %v1670
        %v1685 = vmul.f32 %v1658, %v1666
        %v1686 = vmul.f32 %v1659, %v1670
        %v1687 = vmul.f32 %v1660, %v1666
        %v1688 = vmul.f32 %v1661, %v1670
        %v1689 = vadd.f32 %v1673, %v1674
        %1690 = vadd.xlane.f32.xlu0 %v1689
        %v1691 = vpop.xlane.xlu0 %1690
        %v1692 = vadd.f32 %v1675, %v1676
        %1693 = vadd.xlane.f32.xlu0 %v1692
        %v1694 = vpop.xlane.xlu0 %1693
        %v1695 = vadd.f32 %v1677, %v1678
        %1696 = vadd.xlane.f32.xlu0 %v1695
        %v1697 = vpop.xlane.xlu0 %1696
        %v1698 = vadd.f32 %v1679, %v1680
        %1699 = vadd.xlane.f32.xlu0 %v1698
        %v1700 = vpop.xlane.xlu0 %1699
        %v1701 = vadd.f32 %v1681, %v1682
        %1702 = vadd.xlane.f32.xlu0 %v1701
        %v1703 = vpop.xlane.xlu0 %1702
        %v1704 = vadd.f32 %v1683, %v1684
        %1705 = vadd.xlane.f32.xlu0 %v1704
        %v1706 = vpop.xlane.xlu0 %1705
        %v1707 = vadd.f32 %v1685, %v1686
        %1708 = vadd.xlane.f32.xlu0 %v1707
        %v1709 = vpop.xlane.xlu0 %1708
        %v1710 = vadd.f32 %v1687, %v1688
        %1711 = vadd.xlane.f32.xlu0 %v1710
        %v1712 = vpop.xlane.xlu0 %1711
        %v1714 = vlaneseq
        %v1715 = vshrl.u32 %v1714, 7
        %v1716 = vsub.s32 0, %v1715
        %v1717 = vrot.slane %v303, %v1716
        %v1719 = vadd.f32 %v1691, %v1717
        %v1720 = vadd.f32 %v1694, %v1717
        %v1721 = vadd.f32 %v1697, %v1717
        %v1722 = vadd.f32 %v1700, %v1717
        %v1723 = vadd.f32 %v1703, %v1717
        %v1724 = vadd.f32 %v1706, %v1717
        %v1725 = vadd.f32 %v1709, %v1717
        %v1726 = vadd.f32 %v1712, %v1717
        %vm1727 = vcmask 7168
        %1728 = vst.msk [vmem:[%s297] sm:$0xff] %vm1727, %v1719
        %1729 = vst.msk [vmem:[%s297 + $0x8] sm:$0xff] %vm1727, %v1720
        %1730 = vst.msk [vmem:[%s297 + $0x10] sm:$0xff] %vm1727, %v1721
        %1731 = vst.msk [vmem:[%s297 + $0x18] sm:$0xff] %vm1727, %v1722
        %1732 = vst.msk [vmem:[%s297 + $0x20] sm:$0xff] %vm1727, %v1723
        %1733 = vst.msk [vmem:[%s297 + $0x28] sm:$0xff] %vm1727, %v1724
        %1734 = vst.msk [vmem:[%s297 + $0x30] sm:$0xff] %vm1727, %v1725
        %1735 = vst.msk [vmem:[%s297 + $0x38] sm:$0xff] %vm1727, %v1726
        %v1736 = vld [vmem:[%s1040] sm:$0xff]
        %v1737 = vld [vmem:[%s1040 + $0x8] sm:$0xff]
        %v1738 = vld [vmem:[%s1040 + $0x10] sm:$0xff]
        %v1739 = vld [vmem:[%s1040 + $0x18] sm:$0xff]
        %v1740 = vld [vmem:[%s1040 + $0x20] sm:$0xff]
        %v1741 = vld [vmem:[%s1040 + $0x28] sm:$0xff]
        %v1742 = vld [vmem:[%s1040 + $0x30] sm:$0xff]
        %v1743 = vld [vmem:[%s1040 + $0x38] sm:$0xff]
        %v1744 = vld [vmem:[%s1040 + $0x40] sm:$0xff]
        %v1745 = vld [vmem:[%s1040 + $0x48] sm:$0xff]
        %v1746 = vld [vmem:[%s1040 + $0x50] sm:$0xff]
        %v1747 = vld [vmem:[%s1040 + $0x58] sm:$0xff]
        %v1748 = vld [vmem:[%s1040 + $0x60] sm:$0xff]
        %v1749 = vld [vmem:[%s1040 + $0x68] sm:$0xff]
        %v1750 = vld [vmem:[%s1040 + $0x70] sm:$0xff]
        %v1751 = vld [vmem:[%s1040 + $0x78] sm:$0xff]
        %v1752 = vld [vmem:[#allocation4] sm:$0xff]
        %v1753 = vld [vmem:[#allocation4 + $0x8] sm:$0xff]
        %v1754 = vld [vmem:[#allocation4 + $0x10] sm:$0xff]
        %v1755 = vld [vmem:[#allocation4 + $0x18] sm:$0xff]
        %v1756 = vld [vmem:[#allocation4 + $0x20] sm:$0xff]
        %v1757 = vld [vmem:[#allocation4 + $0x28] sm:$0xff]
        %v1758 = vld [vmem:[#allocation4 + $0x30] sm:$0xff]
        %v1759 = vld [vmem:[#allocation4 + $0x38] sm:$0xff]
        %v1760 = vld [vmem:[#allocation4 + $0x40] sm:$0xff]
        %v1761 = vld [vmem:[#allocation4 + $0x48] sm:$0xff]
        %v1762 = vld [vmem:[#allocation4 + $0x50] sm:$0xff]
        %v1763 = vld [vmem:[#allocation4 + $0x58] sm:$0xff]
        %v1764 = vld [vmem:[#allocation4 + $0x60] sm:$0xff]
        %v1765 = vld [vmem:[#allocation4 + $0x68] sm:$0xff]
        %v1766 = vld [vmem:[#allocation4 + $0x70] sm:$0xff]
        %v1767 = vld [vmem:[#allocation4 + $0x78] sm:$0xff]
        %v1768 = vld [vmem:[#allocation4 + $0x80] sm:$0xff]
        %v1769 = vld [vmem:[#allocation4 + $0x88] sm:$0xff]
        %v1770 = vld [vmem:[#allocation4 + $0x90] sm:$0xff]
        %v1771 = vld [vmem:[#allocation4 + $0x98] sm:$0xff]
        %v1772 = vld [vmem:[#allocation4 + $0xa0] sm:$0xff]
        %v1773 = vld [vmem:[#allocation4 + $0xa8] sm:$0xff]
        %v1774 = vld [vmem:[#allocation4 + $0xb0] sm:$0xff]
        %v1775 = vld [vmem:[#allocation4 + $0xb8] sm:$0xff]
        %v1776 = vld [vmem:[#allocation4 + $0xc0] sm:$0xff]
        %v1777 = vld [vmem:[#allocation4 + $0xc8] sm:$0xff]
        %v1778 = vld [vmem:[#allocation4 + $0xd0] sm:$0xff]
        %v1779 = vld [vmem:[#allocation4 + $0xd8] sm:$0xff]
        %v1780 = vld [vmem:[#allocation4 + $0xe0] sm:$0xff]
        %v1781 = vld [vmem:[#allocation4 + $0xe8] sm:$0xff]
        %v1782 = vld [vmem:[#allocation4 + $0xf0] sm:$0xff]
        %v1783 = vld [vmem:[#allocation4 + $0xf8] sm:$0xff]
        %v1784 = vld [vmem:[#allocation4 + $0x100] sm:$0xff]
        %v1785 = vld [vmem:[#allocation4 + $0x108] sm:$0xff]
        %v1786 = vld [vmem:[#allocation4 + $0x110] sm:$0xff]
        %v1787 = vld [vmem:[#allocation4 + $0x118] sm:$0xff]
        %v1788 = vld [vmem:[#allocation4 + $0x120] sm:$0xff]
        %v1789 = vld [vmem:[#allocation4 + $0x128] sm:$0xff]
        %v1790 = vld [vmem:[#allocation4 + $0x130] sm:$0xff]
        %v1791 = vld [vmem:[#allocation4 + $0x138] sm:$0xff]
        %v1792 = vld [vmem:[#allocation4 + $0x140] sm:$0xff]
        %v1793 = vld [vmem:[#allocation4 + $0x148] sm:$0xff]
        %v1794 = vld [vmem:[#allocation4 + $0x150] sm:$0xff]
        %v1795 = vld [vmem:[#allocation4 + $0x158] sm:$0xff]
        %v1796 = vld [vmem:[#allocation4 + $0x160] sm:$0xff]
        %v1797 = vld [vmem:[#allocation4 + $0x168] sm:$0xff]
        %v1798 = vld [vmem:[#allocation4 + $0x170] sm:$0xff]
        %v1799 = vld [vmem:[#allocation4 + $0x178] sm:$0xff]
        %v1800 = vld [vmem:[#allocation4 + $0x180] sm:$0xff]
        %v1801 = vld [vmem:[#allocation4 + $0x188] sm:$0xff]
        %v1802 = vld [vmem:[#allocation4 + $0x190] sm:$0xff]
        %v1803 = vld [vmem:[#allocation4 + $0x198] sm:$0xff]
        %v1804 = vld [vmem:[#allocation4 + $0x1a0] sm:$0xff]
        %v1805 = vld [vmem:[#allocation4 + $0x1a8] sm:$0xff]
        %v1806 = vld [vmem:[#allocation4 + $0x1b0] sm:$0xff]
        %v1807 = vld [vmem:[#allocation4 + $0x1b8] sm:$0xff]
        %v1808 = vld [vmem:[#allocation4 + $0x1c0] sm:$0xff]
        %v1809 = vld [vmem:[#allocation4 + $0x1c8] sm:$0xff]
        %v1810 = vld [vmem:[#allocation4 + $0x1d0] sm:$0xff]
        %v1811 = vld [vmem:[#allocation4 + $0x1d8] sm:$0xff]
        %v1812 = vld [vmem:[#allocation4 + $0x1e0] sm:$0xff]
        %v1813 = vld [vmem:[#allocation4 + $0x1e8] sm:$0xff]
        %v1814 = vld [vmem:[#allocation4 + $0x1f0] sm:$0xff]
        %v1815 = vld [vmem:[#allocation4 + $0x1f8] sm:$0xff]
        %v1880 = vunpack.c.l.b16 %v1752
        %v1881 = vunpack.c.h.b16 %v1752
        %v1882 = vunpack.c.l.b16 %v1753
        %v1883 = vunpack.c.h.b16 %v1753
        %v1884 = vunpack.c.l.b16 %v1754
        %v1885 = vunpack.c.h.b16 %v1754
        %v1886 = vunpack.c.l.b16 %v1755
        %v1887 = vunpack.c.h.b16 %v1755
        %v1888 = vunpack.c.l.b16 %v1756
        %v1889 = vunpack.c.h.b16 %v1756
        %v1890 = vunpack.c.l.b16 %v1757
        %v1891 = vunpack.c.h.b16 %v1757
        %v1892 = vunpack.c.l.b16 %v1758
        %v1893 = vunpack.c.h.b16 %v1758
        %v1894 = vunpack.c.l.b16 %v1759
        %v1895 = vunpack.c.h.b16 %v1759
        %v1896 = vunpack.c.l.b16 %v1760
        %v1897 = vunpack.c.h.b16 %v1760
        %v1898 = vunpack.c.l.b16 %v1761
        %v1899 = vunpack.c.h.b16 %v1761
        %v1900 = vunpack.c.l.b16 %v1762
        %v1901 = vunpack.c.h.b16 %v1762
        %v1902 = vunpack.c.l.b16 %v1763
        %v1903 = vunpack.c.h.b16 %v1763
        %v1904 = vunpack.c.l.b16 %v1764
        %v1905 = vunpack.c.h.b16 %v1764
        %v1906 = vunpack.c.l.b16 %v1765
        %v1907 = vunpack.c.h.b16 %v1765
        %v1908 = vunpack.c.l.b16 %v1766
        %v1909 = vunpack.c.h.b16 %v1766
        %v1910 = vunpack.c.l.b16 %v1767
        %v1911 = vunpack.c.h.b16 %v1767
        %v1912 = vunpack.c.l.b16 %v1768
        %v1913 = vunpack.c.h.b16 %v1768
        %v1914 = vunpack.c.l.b16 %v1769
        %v1915 = vunpack.c.h.b16 %v1769
        %v1916 = vunpack.c.l.b16 %v1770
        %v1917 = vunpack.c.h.b16 %v1770
        %v1918 = vunpack.c.l.b16 %v1771
        %v1919 = vunpack.c.h.b16 %v1771
        %v1920 = vunpack.c.l.b16 %v1772
        %v1921 = vunpack.c.h.b16 %v1772
        %v1922 = vunpack.c.l.b16 %v1773
        %v1923 = vunpack.c.h.b16 %v1773
        %v1924 = vunpack.c.l.b16 %v1774
        %v1925 = vunpack.c.h.b16 %v1774
        %v1926 = vunpack.c.l.b16 %v1775
        %v1927 = vunpack.c.h.b16 %v1775
        %v1928 = vunpack.c.l.b16 %v1776
        %v1929 = vunpack.c.h.b16 %v1776
        %v1930 = vunpack.c.l.b16 %v1777
        %v1931 = vunpack.c.h.b16 %v1777
        %v1932 = vunpack.c.l.b16 %v1778
        %v1933 = vunpack.c.h.b16 %v1778
        %v1934 = vunpack.c.l.b16 %v1779
        %v1935 = vunpack.c.h.b16 %v1779
        %v1936 = vunpack.c.l.b16 %v1780
        %v1937 = vunpack.c.h.b16 %v1780
        %v1938 = vunpack.c.l.b16 %v1781
        %v1939 = vunpack.c.h.b16 %v1781
        %v1940 = vunpack.c.l.b16 %v1782
        %v1941 = vunpack.c.h.b16 %v1782
        %v1942 = vunpack.c.l.b16 %v1783
        %v1943 = vunpack.c.h.b16 %v1783
        %v1944 = vunpack.c.l.b16 %v1784
        %v1945 = vunpack.c.h.b16 %v1784
        %v1946 = vunpack.c.l.b16 %v1785
        %v1947 = vunpack.c.h.b16 %v1785
        %v1948 = vunpack.c.l.b16 %v1786
        %v1949 = vunpack.c.h.b16 %v1786
        %v1950 = vunpack.c.l.b16 %v1787
        %v1951 = vunpack.c.h.b16 %v1787
        %v1952 = vunpack.c.l.b16 %v1788
        %v1953 = vunpack.c.h.b16 %v1788
        %v1954 = vunpack.c.l.b16 %v1789
        %v1955 = vunpack.c.h.b16 %v1789
        %v1956 = vunpack.c.l.b16 %v1790
        %v1957 = vunpack.c.h.b16 %v1790
        %v1958 = vunpack.c.l.b16 %v1791
        %v1959 = vunpack.c.h.b16 %v1791
        %v1960 = vunpack.c.l.b16 %v1792
        %v1961 = vunpack.c.h.b16 %v1792
        %v1962 = vunpack.c.l.b16 %v1793
        %v1963 = vunpack.c.h.b16 %v1793
        %v1964 = vunpack.c.l.b16 %v1794
        %v1965 = vunpack.c.h.b16 %v1794
        %v1966 = vunpack.c.l.b16 %v1795
        %v1967 = vunpack.c.h.b16 %v1795
        %v1968 = vunpack.c.l.b16 %v1796
        %v1969 = vunpack.c.h.b16 %v1796
        %v1970 = vunpack.c.l.b16 %v1797
        %v1971 = vunpack.c.h.b16 %v1797
        %v1972 = vunpack.c.l.b16 %v1798
        %v1973 = vunpack.c.h.b16 %v1798
        %v1974 = vunpack.c.l.b16 %v1799
        %v1975 = vunpack.c.h.b16 %v1799
        %v1976 = vunpack.c.l.b16 %v1800
        %v1977 = vunpack.c.h.b16 %v1800
        %v1978 = vunpack.c.l.b16 %v1801
        %v1979 = vunpack.c.h.b16 %v1801
        %v1980 = vunpack.c.l.b16 %v1802
        %v1981 = vunpack.c.h.b16 %v1802
        %v1982 = vunpack.c.l.b16 %v1803
        %v1983 = vunpack.c.h.b16 %v1803
        %v1984 = vunpack.c.l.b16 %v1804
        %v1985 = vunpack.c.h.b16 %v1804
        %v1986 = vunpack.c.l.b16 %v1805
        %v1987 = vunpack.c.h.b16 %v1805
        %v1988 = vunpack.c.l.b16 %v1806
        %v1989 = vunpack.c.h.b16 %v1806
        %v1990 = vunpack.c.l.b16 %v1807
        %v1991 = vunpack.c.h.b16 %v1807
        %v1992 = vunpack.c.l.b16 %v1808
        %v1993 = vunpack.c.h.b16 %v1808
        %v1994 = vunpack.c.l.b16 %v1809
        %v1995 = vunpack.c.h.b16 %v1809
        %v1996 = vunpack.c.l.b16 %v1810
        %v1997 = vunpack.c.h.b16 %v1810
        %v1998 = vunpack.c.l.b16 %v1811
        %v1999 = vunpack.c.h.b16 %v1811
        %v2000 = vunpack.c.l.b16 %v1812
        %v2001 = vunpack.c.h.b16 %v1812
        %v2002 = vunpack.c.l.b16 %v1813
        %v2003 = vunpack.c.h.b16 %v1813
        %v2004 = vunpack.c.l.b16 %v1814
        %v2005 = vunpack.c.h.b16 %v1814
        %v2006 = vunpack.c.l.b16 %v1815
        %v2007 = vunpack.c.h.b16 %v1815
        %v2008 = vpack.c.b16 %v1882, %v1880
        %v2009 = vpack.c.b16 %v1883, %v1881
        %v2010 = vpack.c.b16 %v1886, %v1884
        %v2011 = vpack.c.b16 %v1887, %v1885
        %v2012 = vpack.c.b16 %v1890, %v1888
        %v2013 = vpack.c.b16 %v1891, %v1889
        %v2014 = vpack.c.b16 %v1894, %v1892
        %v2015 = vpack.c.b16 %v1895, %v1893
        %v2016 = vpack.c.b16 %v1898, %v1896
        %v2017 = vpack.c.b16 %v1899, %v1897
        %v2018 = vpack.c.b16 %v1902, %v1900
        %v2019 = vpack.c.b16 %v1903, %v1901
        %v2020 = vpack.c.b16 %v1906, %v1904
        %v2021 = vpack.c.b16 %v1907, %v1905
        %v2022 = vpack.c.b16 %v1910, %v1908
        %v2023 = vpack.c.b16 %v1911, %v1909
        %v2024 = vpack.c.b16 %v1914, %v1912
        %v2025 = vpack.c.b16 %v1915, %v1913
        %v2026 = vpack.c.b16 %v1918, %v1916
        %v2027 = vpack.c.b16 %v1919, %v1917
        %v2028 = vpack.c.b16 %v1922, %v1920
        %v2029 = vpack.c.b16 %v1923, %v1921
        %v2030 = vpack.c.b16 %v1926, %v1924
        %v2031 = vpack.c.b16 %v1927, %v1925
        %v2032 = vpack.c.b16 %v1930, %v1928
        %v2033 = vpack.c.b16 %v1931, %v1929
        %v2034 = vpack.c.b16 %v1934, %v1932
        %v2035 = vpack.c.b16 %v1935, %v1933
        %v2036 = vpack.c.b16 %v1938, %v1936
        %v2037 = vpack.c.b16 %v1939, %v1937
        %v2038 = vpack.c.b16 %v1942, %v1940
        %v2039 = vpack.c.b16 %v1943, %v1941
        %v2040 = vpack.c.b16 %v1946, %v1944
        %v2041 = vpack.c.b16 %v1947, %v1945
        %v2042 = vpack.c.b16 %v1950, %v1948
        %v2043 = vpack.c.b16 %v1951, %v1949
        %v2044 = vpack.c.b16 %v1954, %v1952
        %v2045 = vpack.c.b16 %v1955, %v1953
        %v2046 = vpack.c.b16 %v1958, %v1956
        %v2047 = vpack.c.b16 %v1959, %v1957
        %v2048 = vpack.c.b16 %v1962, %v1960
        %v2049 = vpack.c.b16 %v1963, %v1961
        %v2050 = vpack.c.b16 %v1966, %v1964
        %v2051 = vpack.c.b16 %v1967, %v1965
        %v2052 = vpack.c.b16 %v1970, %v1968
        %v2053 = vpack.c.b16 %v1971, %v1969
        %v2054 = vpack.c.b16 %v1974, %v1972
        %v2055 = vpack.c.b16 %v1975, %v1973
        %v2056 = vpack.c.b16 %v1978, %v1976
        %v2057 = vpack.c.b16 %v1979, %v1977
        %v2058 = vpack.c.b16 %v1982, %v1980
        %v2059 = vpack.c.b16 %v1983, %v1981
        %v2060 = vpack.c.b16 %v1986, %v1984
        %v2061 = vpack.c.b16 %v1987, %v1985
        %v2062 = vpack.c.b16 %v1990, %v1988
        %v2063 = vpack.c.b16 %v1991, %v1989
        %v2064 = vpack.c.b16 %v1994, %v1992
        %v2065 = vpack.c.b16 %v1995, %v1993
        %v2066 = vpack.c.b16 %v1998, %v1996
        %v2067 = vpack.c.b16 %v1999, %v1997
        %v2068 = vpack.c.b16 %v2002, %v2000
        %v2069 = vpack.c.b16 %v2003, %v2001
        %v2070 = vpack.c.b16 %v2006, %v2004
        %v2071 = vpack.c.b16 %v2007, %v2005
        %2136 = vmatprep.subr.bf16.mxu0 %v2009
        %2137 = vmatpush1.bf16.msra.mxu0 %v2008
        %2138 = vmatprep.subr.bf16.mxu0 %v2011
        %2139 = vmatpush1.bf16.msra.mxu0 %v2010
        %2140 = vmatprep.subr.bf16.mxu0 %v2013
        %2141 = vmatpush1.bf16.msra.mxu0 %v2012
        %2142 = vmatprep.subr.bf16.mxu0 %v2015
        %2143 = vmatpush1.bf16.msra.mxu0 %v2014
        %2144 = vmatprep.subr.bf16.mxu0 %v2017
        %2145 = vmatpush1.bf16.msra.mxu0 %v2016
        %2146 = vmatprep.subr.bf16.mxu0 %v2019
        %2147 = vmatpush1.bf16.msra.mxu0 %v2018
        %2148 = vmatprep.subr.bf16.mxu0 %v2021
        %2149 = vmatpush1.bf16.msra.mxu0 %v2020
        %2150 = vmatprep.subr.bf16.mxu0 %v2023
        %2151 = vmatpush1.bf16.msra.mxu0 %v2022
        %2152 = vmatprep.subr.bf16.mxu0 %v2025
        %2153 = vmatpush1.bf16.msra.mxu0 %v2024
        %2154 = vmatprep.subr.bf16.mxu0 %v2027
        %2155 = vmatpush1.bf16.msra.mxu0 %v2026
        %2156 = vmatprep.subr.bf16.mxu0 %v2029
        %2157 = vmatpush1.bf16.msra.mxu0 %v2028
        %2158 = vmatprep.subr.bf16.mxu0 %v2031
        %2159 = vmatpush1.bf16.msra.mxu0 %v2030
        %2160 = vmatprep.subr.bf16.mxu0 %v2033
        %2161 = vmatpush1.bf16.msra.mxu0 %v2032
        %2162 = vmatprep.subr.bf16.mxu0 %v2035
        %2163 = vmatpush1.bf16.msra.mxu0 %v2034
        %2164 = vmatprep.subr.bf16.mxu0 %v2037
        %2165 = vmatpush1.bf16.msra.mxu0 %v2036
        %2166 = vmatprep.subr.bf16.mxu0 %v2039
        %2167 = vmatpush1.bf16.msra.mxu0 %v2038
        %2168 = vmatprep.mubr.bf16.mxu0 %v1737
        %2169 = vmatmul.mubr.bf16.gmra.mrb[0].mxu0 %v1736
        %v2170 = vpop.f32.mrb[0].mxu0
        %v2171 = vadd.f32 %v1141, %v2170
        %v2172 = vpop.f32.mrb[0].mxu0
        %v2173 = vadd.f32 %v1145, %v2172
        %v2174 = vpop.f32.mrb[0].mxu0
        %v2175 = vadd.f32 %v1141, %v2174
        %v2176 = vpop.f32.mrb[0].mxu0
        %v2177 = vadd.f32 %v1145, %v2176
        %2178 = vmatprep.mubr.bf16.mxu0 %v1741
        %2179 = vmatmul.mubr.bf16.gmra.mrb[0].mxu0 %v1740
        %v2180 = vpop.f32.mrb[0].mxu0
        %v2181 = vadd.f32 %v1141, %v2180
        %v2182 = vpop.f32.mrb[0].mxu0
        %v2183 = vadd.f32 %v1145, %v2182
        %v2184 = vpop.f32.mrb[0].mxu0
        %v2185 = vadd.f32 %v1141, %v2184
        %v2186 = vpop.f32.mrb[0].mxu0
        %v2187 = vadd.f32 %v1145, %v2186
        %2188 = vmatprep.mubr.bf16.mxu0 %v1745
        %2189 = vmatmul.mubr.bf16.gmra.mrb[0].mxu0 %v1744
        %v2190 = vpop.f32.mrb[0].mxu0
        %v2191 = vadd.f32 %v1141, %v2190
        %v2192 = vpop.f32.mrb[0].mxu0
        %v2193 = vadd.f32 %v1145, %v2192
        %v2194 = vpop.f32.mrb[0].mxu0
        %v2195 = vadd.f32 %v1141, %v2194
        %v2196 = vpop.f32.mrb[0].mxu0
        %v2197 = vadd.f32 %v1145, %v2196
        %2198 = vmatprep.mubr.bf16.mxu0 %v1749
        %2199 = vmatmul.mubr.bf16.gmra.mrb[0].mxu0 %v1748
        %v2200 = vpop.f32.mrb[0].mxu0
        %v2201 = vadd.f32 %v1141, %v2200
        %v2202 = vpop.f32.mrb[0].mxu0
        %v2203 = vadd.f32 %v1145, %v2202
        %v2204 = vpop.f32.mrb[0].mxu0
        %v2205 = vadd.f32 %v1141, %v2204
        %v2206 = vpop.f32.mrb[0].mxu0
        %v2207 = vadd.f32 %v1145, %v2206
        %2208 = vdwg.mxu0
        %2209 = vmatprep.subr.bf16.mxu0 %v2041
        %2210 = vmatpush1.bf16.msra.mxu0 %v2040
        %2211 = vmatprep.subr.bf16.mxu0 %v2043
        %2212 = vmatpush1.bf16.msra.mxu0 %v2042
        %2213 = vmatprep.subr.bf16.mxu0 %v2045
        %2214 = vmatpush1.bf16.msra.mxu0 %v2044
        %2215 = vmatprep.subr.bf16.mxu0 %v2047
        %2216 = vmatpush1.bf16.msra.mxu0 %v2046
        %2217 = vmatprep.subr.bf16.mxu0 %v2049
        %2218 = vmatpush1.bf16.msra.mxu0 %v2048
        %2219 = vmatprep.subr.bf16.mxu0 %v2051
        %2220 = vmatpush1.bf16.msra.mxu0 %v2050
        %2221 = vmatprep.subr.bf16.mxu0 %v2053
        %2222 = vmatpush1.bf16.msra.mxu0 %v2052
        %2223 = vmatprep.subr.bf16.mxu0 %v2055
        %2224 = vmatpush1.bf16.msra.mxu0 %v2054
        %2225 = vmatprep.subr.bf16.mxu0 %v2057
        %2226 = vmatpush1.bf16.msra.mxu0 %v2056
        %2227 = vmatprep.subr.bf16.mxu0 %v2059
        %2228 = vmatpush1.bf16.msra.mxu0 %v2058
        %2229 = vmatprep.subr.bf16.mxu0 %v2061
        %2230 = vmatpush1.bf16.msra.mxu0 %v2060
        %2231 = vmatprep.subr.bf16.mxu0 %v2063
        %2232 = vmatpush1.bf16.msra.mxu0 %v2062
        %2233 = vmatprep.subr.bf16.mxu0 %v2065
        %2234 = vmatpush1.bf16.msra.mxu0 %v2064
        %2235 = vmatprep.subr.bf16.mxu0 %v2067
        %2236 = vmatpush1.bf16.msra.mxu0 %v2066
        %2237 = vmatprep.subr.bf16.mxu0 %v2069
        %2238 = vmatpush1.bf16.msra.mxu0 %v2068
        %2239 = vmatprep.subr.bf16.mxu0 %v2071
        %2240 = vmatpush1.bf16.msra.mxu0 %v2070
        %2241 = vmatprep.mubr.bf16.mxu0 %v1739
        %2242 = vmatmul.mubr.bf16.gmra.mrb[0].mxu0 %v1738
        %v2243 = vpop.f32.mrb[0].mxu0
        %v2244 = vadd.f32 %v2171, %v2243
        %v2245 = vpop.f32.mrb[0].mxu0
        %v2246 = vadd.f32 %v2173, %v2245
        %v2247 = vpop.f32.mrb[0].mxu0
        %v2248 = vadd.f32 %v2175, %v2247
        %v2249 = vpop.f32.mrb[0].mxu0
        %v2250 = vadd.f32 %v2177, %v2249
        %2251 = vmatprep.mubr.bf16.mxu0 %v1743
        %2252 = vmatmul.mubr.bf16.gmra.mrb[0].mxu0 %v1742
        %v2253 = vpop.f32.mrb[0].mxu0
        %v2254 = vadd.f32 %v2181, %v2253
        %v2255 = vpop.f32.mrb[0].mxu0
        %v2256 = vadd.f32 %v2183, %v2255
        %v2257 = vpop.f32.mrb[0].mxu0
        %v2258 = vadd.f32 %v2185, %v2257
        %v2259 = vpop.f32.mrb[0].mxu0
        %v2260 = vadd.f32 %v2187, %v2259
        %2261 = vmatprep.mubr.bf16.mxu0 %v1747
        %2262 = vmatmul.mubr.bf16.gmra.mrb[0].mxu0 %v1746
        %v2263 = vpop.f32.mrb[0].mxu0
        %v2264 = vadd.f32 %v2191, %v2263
        %v2265 = vpop.f32.mrb[0].mxu0
        %v2266 = vadd.f32 %v2193, %v2265
        %v2267 = vpop.f32.mrb[0].mxu0
        %v2268 = vadd.f32 %v2195, %v2267
        %v2269 = vpop.f32.mrb[0].mxu0
        %v2270 = vadd.f32 %v2197, %v2269
        %2271 = vmatprep.mubr.bf16.mxu0 %v1751
        %2272 = vmatmul.mubr.bf16.gmra.mrb[0].mxu0 %v1750
        %v2273 = vpop.f32.mrb[0].mxu0
        %v2274 = vadd.f32 %v2201, %v2273
        %v2275 = vpop.f32.mrb[0].mxu0
        %v2276 = vadd.f32 %v2203, %v2275
        %v2277 = vpop.f32.mrb[0].mxu0
        %v2278 = vadd.f32 %v2205, %v2277
        %v2279 = vpop.f32.mrb[0].mxu0
        %v2280 = vadd.f32 %v2207, %v2279
        %2281 = vdwg.mxu0
        %vm2282 = vcmp.ge.f32.partialorder %v2244, 0.0
        %vm2283 = vcmp.ge.f32.partialorder %v2246, 0.0
        %vm2284 = vcmp.ge.f32.partialorder %v2248, 0.0
        %vm2285 = vcmp.ge.f32.partialorder %v2250, 0.0
        %vm2286 = vcmp.ge.f32.partialorder %v2254, 0.0
        %vm2287 = vcmp.ge.f32.partialorder %v2256, 0.0
        %vm2288 = vcmp.ge.f32.partialorder %v2258, 0.0
        %vm2289 = vcmp.ge.f32.partialorder %v2260, 0.0
        %vm2290 = vcmp.ge.f32.partialorder %v2264, 0.0
        %vm2291 = vcmp.ge.f32.partialorder %v2266, 0.0
        %vm2292 = vcmp.ge.f32.partialorder %v2268, 0.0
        %vm2293 = vcmp.ge.f32.partialorder %v2270, 0.0
        %vm2294 = vcmp.ge.f32.partialorder %v2274, 0.0
        %vm2295 = vcmp.ge.f32.partialorder %v2276, 0.0
        %vm2296 = vcmp.ge.f32.partialorder %v2278, 0.0
        %vm2297 = vcmp.ge.f32.partialorder %v2280, 0.0
        %v2298 = vmul.f32 %v2244, 0.2
        %v2299 = vmul.f32 %v2246, 0.2
        %v2300 = vmul.f32 %v2248, 0.2
        %v2301 = vmul.f32 %v2250, 0.2
        %v2302 = vmul.f32 %v2254, 0.2
        %v2303 = vmul.f32 %v2256, 0.2
        %v2304 = vmul.f32 %v2258, 0.2
        %v2305 = vmul.f32 %v2260, 0.2
        %v2306 = vmul.f32 %v2264, 0.2
        %v2307 = vmul.f32 %v2266, 0.2
        %v2308 = vmul.f32 %v2268, 0.2
        %v2309 = vmul.f32 %v2270, 0.2
        %v2310 = vmul.f32 %v2274, 0.2
        %v2311 = vmul.f32 %v2276, 0.2
        %v2312 = vmul.f32 %v2278, 0.2
        %v2313 = vmul.f32 %v2280, 0.2
        %v2314 = vsel %vm2282, %v2244, %v2298
        %v2315 = vsel %vm2283, %v2246, %v2299
        %v2316 = vsel %vm2284, %v2248, %v2300
        %v2317 = vsel %vm2285, %v2250, %v2301
        %v2318 = vsel %vm2286, %v2254, %v2302
        %v2319 = vsel %vm2287, %v2256, %v2303
        %v2320 = vsel %vm2288, %v2258, %v2304
        %v2321 = vsel %vm2289, %v2260, %v2305
        %v2322 = vsel %vm2290, %v2264, %v2306
        %v2323 = vsel %vm2291, %v2266, %v2307
        %v2324 = vsel %vm2292, %v2268, %v2308
        %v2325 = vsel %vm2293, %v2270, %v2309
        %v2326 = vsel %vm2294, %v2274, %v2310
        %v2327 = vsel %vm2295, %v2276, %v2311
        %v2328 = vsel %vm2296, %v2278, %v2312
        %v2329 = vsel %vm2297, %v2280, %v2313
        %v2330 = vmul.f32 %v2314, %v1666
        %v2331 = vmul.f32 %v2315, %v1670
        %v2332 = vmul.f32 %v2316, %v1666
        %v2333 = vmul.f32 %v2317, %v1670
        %v2334 = vmul.f32 %v2318, %v1666
        %v2335 = vmul.f32 %v2319, %v1670
        %v2336 = vmul.f32 %v2320, %v1666
        %v2337 = vmul.f32 %v2321, %v1670
        %v2338 = vmul.f32 %v2322, %v1666
        %v2339 = vmul.f32 %v2323, %v1670
        %v2340 = vmul.f32 %v2324, %v1666
        %v2341 = vmul.f32 %v2325, %v1670
        %v2342 = vmul.f32 %v2326, %v1666
        %v2343 = vmul.f32 %v2327, %v1670
        %v2344 = vmul.f32 %v2328, %v1666
        %v2345 = vmul.f32 %v2329, %v1670
        %v2346 = vadd.f32 %v2330, %v2331
        %2347 = vadd.xlane.f32.xlu0 %v2346
        %v2348 = vpop.xlane.xlu0 %2347
        %v2349 = vadd.f32 %v2332, %v2333
        %2350 = vadd.xlane.f32.xlu0 %v2349
        %v2351 = vpop.xlane.xlu0 %2350
        %v2352 = vadd.f32 %v2334, %v2335
        %2353 = vadd.xlane.f32.xlu0 %v2352
        %v2354 = vpop.xlane.xlu0 %2353
        %v2355 = vadd.f32 %v2336, %v2337
        %2356 = vadd.xlane.f32.xlu0 %v2355
        %v2357 = vpop.xlane.xlu0 %2356
        %v2358 = vadd.f32 %v2338, %v2339
        %2359 = vadd.xlane.f32.xlu0 %v2358
        %v2360 = vpop.xlane.xlu0 %2359
        %v2361 = vadd.f32 %v2340, %v2341
        %2362 = vadd.xlane.f32.xlu0 %v2361
        %v2363 = vpop.xlane.xlu0 %2362
        %v2364 = vadd.f32 %v2342, %v2343
        %2365 = vadd.xlane.f32.xlu0 %v2364
        %v2366 = vpop.xlane.xlu0 %2365
        %v2367 = vadd.f32 %v2344, %v2345
        %2368 = vadd.xlane.f32.xlu0 %v2367
        %v2369 = vpop.xlane.xlu0 %2368
        %v2370 = vadd.f32 %v2348, %v1717
        %v2371 = vadd.f32 %v2351, %v1717
        %v2372 = vadd.f32 %v2354, %v1717
        %v2373 = vadd.f32 %v2357, %v1717
        %v2374 = vadd.f32 %v2360, %v1717
        %v2375 = vadd.f32 %v2363, %v1717
        %v2376 = vadd.f32 %v2366, %v1717
        %v2377 = vadd.f32 %v2369, %v1717
        %s2378 = scalar_lea.vmem %s297, 64
        %2379 = vst.msk [vmem:[%s2378] sm:$0xff] %vm1727, %v2370
        %2380 = vst.msk [vmem:[%s2378 + $0x8] sm:$0xff] %vm1727, %v2371
        %2381 = vst.msk [vmem:[%s2378 + $0x10] sm:$0xff] %vm1727, %v2372
        %2382 = vst.msk [vmem:[%s2378 + $0x18] sm:$0xff] %vm1727, %v2373
        %2383 = vst.msk [vmem:[%s2378 + $0x20] sm:$0xff] %vm1727, %v2374
        %2384 = vst.msk [vmem:[%s2378 + $0x28] sm:$0xff] %vm1727, %v2375
        %2385 = vst.msk [vmem:[%s2378 + $0x30] sm:$0xff] %vm1727, %v2376
        %2386 = vst.msk [vmem:[%s2378 + $0x38] sm:$0xff] %vm1727, %v2377
        %s2387 = smul.u32 16, %s21
        %p2388 = scmp.lt.s32.totalorder %s2387, 31
        %s2389 = scalar_select %p2388, %s2387, 31
        %s2390 = smul.addr %s2389, 8
        %s2391 = scalar_lea.vmem %s7, %s2390
        // Predicated region
        $region53: #{discriminator_t.1} parent=47 // pred_check
          %p2392 = pneg %p191
        $region54: #{discriminator_t.1} parent=47 // pred_check_branch
          %2394 = sbr.rel (%p2392) target = $region56
        $region55: #{discriminator_t.1} parent=47 // pred_region
          %s2395 = smul.u32 16, %s21
        $region56: #{discriminator_t.1} parent=47 // pred_fallthru
          _
      $region48: #{discriminator_t.1} parent=5 // pred_fallthru
        _
      %p2396 = scmp.le.s32.totalorder 2, %s16
      // Predicated region
      $region57: #{discriminator_t.1} parent=5 // pred_check
        %p2397 = pneg %p2396
      $region58: #{discriminator_t.1} parent=5 // pred_check_branch
        %2399 = sbr.rel (%p2397) target = $region60
      $region59: #{discriminator_t.1} parent=5 // pred_region
        %s2400 = ssub.s32 %s16, 2
        // Predicated region
        $region61: #{discriminator_t.1} parent=59 // pred_check
          %p2401 = pneg %p197
        $region62: #{discriminator_t.1} parent=59 // pred_check_branch
          %2403 = sbr.rel (%p2401) target = $region64
        $region63: #{discriminator_t.1} parent=59 // pred_region
          %s2404 = smul.u32 16, %s22
          %p2405 = scmp.lt.s32.totalorder %s2404, 31
          %s2406 = scalar_select %p2405, %s2404, 31
          %s2407 = smul.addr %s2406, 8
          %s2408 = scalar_lea.vmem %s7, %s2407
        $region64: #{discriminator_t.1} parent=59 // pred_fallthru
          _
      $region60: #{discriminator_t.1} parent=5 // pred_fallthru
        _
    $region6: #{discriminator_t.1} parent=1 // loop_footer
      %s20 = sadd.s32 1, %s16
    $region7: #{discriminator_t.1} parent=1 // loop_footer_branch
      %15 = sbr.rel target = $region3
    $region8: #{discriminator_t.1} parent=1 // loop_exit
      _
    %2409 = vsyncpa [#allocation5], 1
    %s2410 = scalar_lea.sflag [#allocation5], 1
    %2411 = vsyncpa %s2410, 1

</llo_original>
